<compile_context>
chip_gen: v7x
topology: tpu7x:2x2x1
jax: 0.10.0
libtpu: 0.0.40
codegen_flags: <defaults>
</compile_context>

<pallas_src>
import functools

import jax
import jax.numpy as jnp
from jax.experimental import pallas as pl
from jax.experimental.pallas import tpu as pltpu


def dgcnn_kernel(x_ref, wblk_ref, acat_ref, bias_ref, w1_ref, b1_ref,
                 w2_ref, b2_ref, out_ref, flat_ref, *,
                 n_batch, num_e, num_layers, hid):
    """Fused Chebynet GCN + ReLU + fc1 + ReLU + fc2 for the whole batch.

    x_ref:    (E, N*C)       x in electrode-major / sample-packed-lane layout.
    wblk_ref: (N*C, K*N*H)   block-diag(BN-folded W'_k) stacked over k.
    acat_ref: (E, K*E)       Chebyshev supports concatenated along lanes.
    bias_ref: (E, N*H)       BN shift contribution, tiled over the batch.
    w1_ref:   (E*H, F1);  b1_ref: (1, F1)
    w2_ref:   (F1, NC_pad);  b2_ref: (1, NC_pad)   (lane-padded fc2)
    flat_ref: VMEM scratch (N, E*H) used only for the (E,N*H)->(N,E*H) relayout.
    """
    nh = n_batch * hid

    # ---- Phase A: whole-batch GCN in two MXU pushes.
    # z[e, k*N*H + n*H + h] = sum_c x[n,e,c] * W'_k[c,h]
    z = jnp.dot(x_ref[...], wblk_ref[...], preferred_element_type=jnp.float32)
    # Stack the K (E, N*H) blocks along sublanes -> (K*E, N*H).
    stacked = jnp.concatenate(
        [z[:, k * nh:(k + 1) * nh] for k in range(num_layers)], axis=0)
    # Single adjacency matmul performs the k-sum: (E, K*E) @ (K*E, N*H).
    feat = jnp.dot(acat_ref[...], stacked, preferred_element_type=jnp.float32)
    feat = jnp.maximum(feat + bias_ref[...], 0.0)            # (E, N*H)

    # ---- Relayout (E, N*H) -> (N, E*H) with static masked stores (2 KB).
    for n in range(n_batch):
        for e in range(num_e):
            flat_ref[pl.ds(n, 1), pl.ds(e * hid, hid)] = (
                feat[e:e + 1, n * hid:(n + 1) * hid])

    # ---- Phase B: fc1 (single matmul, bias folded into the add) + ReLU + fc2.
    flat = flat_ref[...]                                     # (N, E*H)
    h1 = jnp.dot(flat, w1_ref[...],
                 preferred_element_type=jnp.float32) + b1_ref[...]
    h1 = jnp.maximum(h1, 0.0)                                # (N, F1)
    out = jnp.dot(h1, w2_ref[...],
                  preferred_element_type=jnp.float32) + b2_ref[...]
    out_ref[...] = out.astype(out_ref.dtype)                 # (N, NC_pad)


def dgcnn_forward(x, A, gc_w, bn_gamma, bn_beta, w1, b1, w2, b2):
    N, E, C = x.shape
    K, _, H = gc_w.shape
    F1 = w1.shape[1]
    NC = w2.shape[1]
    nc_pad = ((NC + 127) // 128) * 128

    # --- BatchNorm1d (training-mode batch statistics), folded to scale/shift ---
    mean = jnp.mean(x, axis=(0, 1))
    var = jnp.mean((x - mean) ** 2, axis=(0, 1))             # biased variance
    scale = bn_gamma / jnp.sqrt(var + 1e-5)
    shift = bn_beta - mean * scale

    # --- normalize_A (tiny E x E glue) ---
    Ar = jnp.maximum(A, 0.0)
    d = 1.0 / jnp.sqrt(jnp.sum(Ar, axis=1) + 1e-10)
    L = d[:, None] * Ar * d[None, :]                         # == D @ A @ D

    # --- generate_cheby_adj: [I, L, L @ L, ...] (powers of L, per torcheeg) ---
    supports = [jnp.eye(E, dtype=x.dtype)]
    if K > 1:
        supports.append(L)
    for _ in range(2, K):
        supports.append(jnp.matmul(supports[-1], L))
    adjs = jnp.stack(supports, axis=0)                        # (K, E, E)
    acat = jnp.concatenate(supports, axis=1)                  # (E, K*E)

    # --- Fold BN into the GCN weights:
    #     A_k (x*scale + shift) W_k = A_k x (diag(scale) W_k) + (A_k 1)(shift W_k)
    w_scaled = gc_w * scale[None, :, None]                    # (K, C, H)
    rowsum = jnp.sum(adjs, axis=2)                            # (K, E) == A_k @ 1
    sw = jnp.einsum('c,kch->kh', shift, gc_w)                 # (K, H)
    bias_eh = jnp.einsum('ke,kh->eh', rowsum, sw)             # (E, H)
    bias_tiled = jnp.tile(bias_eh, (1, N))                    # (E, N*H)

    # --- Layouts for the batched kernel ---
    x_e_nc = jnp.transpose(x, (1, 0, 2)).reshape(E, N * C)    # (E, N*C)
    eye_n = jnp.eye(N, dtype=x.dtype)
    wblk = jnp.concatenate(
        [jnp.kron(eye_n, w_scaled[k]) for k in range(K)], axis=1)  # (N*C, K*N*H)
    b1_2d = b1.reshape(1, F1)
    w2_pad = jnp.pad(w2, ((0, 0), (0, nc_pad - NC)))          # (F1, NC_pad)
    b2_pad = jnp.pad(b2.reshape(1, NC), ((0, 0), (0, nc_pad - NC)))

    flops = (2 * E * (N * C) * (K * N * H)    # x @ wblk
             + 2 * E * (K * E) * (N * H)      # Acat @ stacked (GCN aggregation)
             + 2 * N * (E * H) * F1           # fc1
             + 2 * N * F1 * nc_pad)           # fc2
    operands = (x_e_nc, wblk, acat, bias_tiled, w1, b1_2d, w2_pad, b2_pad)
    bytes_accessed = sum(4 * op.size for op in operands) + 4 * N * nc_pad

    kernel = functools.partial(dgcnn_kernel, n_batch=N, num_e=E,
                               num_layers=K, hid=H)
    out_pad = pl.pallas_call(
        kernel,
        out_shape=jax.ShapeDtypeStruct((N, nc_pad), jnp.float32),
        in_specs=[pl.BlockSpec(memory_space=pltpu.MemorySpace.VMEM)] * len(operands),
        out_specs=pl.BlockSpec(memory_space=pltpu.MemorySpace.VMEM),
        scratch_shapes=[pltpu.VMEM((N, E * H), jnp.float32)],
        cost_estimate=pl.CostEstimate(flops=flops, transcendentals=0,
                                      bytes_accessed=bytes_accessed),
    )(*operands)
    return out_pad[:, :NC]


def reference_forward(x, A, gc_w, bn_gamma, bn_beta, w1, b1, w2, b2):
    """Pure-JAX replica of the PyTorch forward, for correctness checking."""
    mean = jnp.mean(x, axis=(0, 1))
    var = jnp.mean((x - mean) ** 2, axis=(0, 1))
    xh = (x - mean) / jnp.sqrt(var + 1e-5) * bn_gamma + bn_beta
    Ar = jnp.maximum(A, 0.0)
    d = 1.0 / jnp.sqrt(jnp.sum(Ar, axis=1) + 1e-10)
    L = d[:, None] * Ar * d[None, :]
    K = gc_w.shape[0]
    E = A.shape[0]
    sup = [jnp.eye(E, dtype=x.dtype)]
    if K > 1:
        sup.append(L)
    for _ in range(2, K):
        sup.append(jnp.matmul(sup[-1], L))
    res = 0.0
    for i in range(K):
        res = res + jnp.matmul(jnp.matmul(sup[i], xh), gc_w[i])
    res = jnp.maximum(res, 0.0)
    flat = res.reshape(x.shape[0], -1)
    h = jnp.maximum(flat @ w1 + b1, 0.0)
    return h @ w2 + b2


if __name__ == "__main__":
    # Small shapes consistent with DGCNN(in_channels, num_electrodes, num_layers,
    # hid_channels, num_classes).
    N, E, C, H, K, NC = 4, 16, 8, 32, 3, 4

    key = jax.random.PRNGKey(0)
    kx, ka, kg, k1, k2 = jax.random.split(key, 5)

    x = jax.random.normal(kx, (N, E, C), jnp.float32)

    # Deterministic "xavier_normal"-style parameter init (matches PyTorch shapes).
    A = jax.random.normal(ka, (E, E), jnp.float32) * jnp.sqrt(2.0 / (E + E))
    gc_w = jax.random.normal(kg, (K, C, H), jnp.float32) * jnp.sqrt(2.0 / (C + H))
    w1 = jax.random.normal(k1, (E * H, 64), jnp.float32) * jnp.sqrt(2.0 / (E * H + 64))
    b1 = jnp.zeros((64,), jnp.float32)
    w2 = jax.random.normal(k2, (64, NC), jnp.float32) * jnp.sqrt(2.0 / (64 + NC))
    b2 = jnp.zeros((NC,), jnp.float32)
    bn_gamma = jnp.ones((C,), jnp.float32)
    bn_beta = jnp.zeros((C,), jnp.float32)

    out = jax.jit(dgcnn_forward)(x, A, gc_w, bn_gamma, bn_beta, w1, b1, w2, b2)
    out = jax.block_until_ready(out)

    ref = reference_forward(x, A, gc_w, bn_gamma, bn_beta, w1, b1, w2, b2)
    assert out.shape == (N, NC)
    # Reassociated matmul order (BN folded into weights, k-sum done inside one
    # concatenated-adjacency matmul) gives slightly different f32 rounding than
    # the reference.
    assert jnp.allclose(out, ref, atol=1e-3, rtol=1e-3), "mismatch vs JAX reference"

    print("KERNEL_OK")
</pallas_src>

<mosaic_0001>
module attributes {stable_mosaic.version = 11 : i64} {
  func.func @dgcnn_kernel(%arg0: memref<16x32xf32, #tpu.memory_space<vmem>>, %arg1: memref<32x384xf32, #tpu.memory_space<vmem>>, %arg2: memref<16x48xf32, #tpu.memory_space<vmem>>, %arg3: memref<16x128xf32, #tpu.memory_space<vmem>>, %arg4: memref<512x64xf32, #tpu.memory_space<vmem>>, %arg5: memref<1x64xf32, #tpu.memory_space<vmem>>, %arg6: memref<64x128xf32, #tpu.memory_space<vmem>>, %arg7: memref<1x128xf32, #tpu.memory_space<vmem>>, %arg8: memref<4x128xf32, #tpu.memory_space<vmem>>, %arg9: memref<4x512xf32, #tpu.memory_space<vmem>>) attributes {dimension_semantics = [], scalar_prefetch = 0 : i64, scratch_operands = 1 : i64, tpu.core_type = #tpu.core_type<tc>} {
    %c0 = arith.constant 0 : index
    %c0_0 = arith.constant 0 : index
    %0 = vector.load %arg0[%c0, %c0_0] : memref<16x32xf32, #tpu.memory_space<vmem>>, vector<16x32xf32>
    %c0_1 = arith.constant 0 : index
    %c0_2 = arith.constant 0 : index
    %1 = vector.load %arg1[%c0_1, %c0_2] : memref<32x384xf32, #tpu.memory_space<vmem>>, vector<32x384xf32>
    %cst = arith.constant dense<0.000000e+00> : vector<16x384xf32>
    %2 = tpu.matmul %0, %1, %cst {dimension_numbers = #tpu.dot_dimension_numbers<[1], [0], [0], [1], [0, 0, 1, 1], [], []>} : vector<16x32xf32>, vector<32x384xf32>, vector<16x384xf32> -> vector<16x384xf32>
    %3 = vector.extract_strided_slice %2 {offsets = [0, 0], sizes = [16, 128], strides = [1, 1]} : vector<16x384xf32> to vector<16x128xf32>
    %4 = vector.extract_strided_slice %2 {offsets = [0, 128], sizes = [16, 128], strides = [1, 1]} : vector<16x384xf32> to vector<16x128xf32>
    %5 = vector.extract_strided_slice %2 {offsets = [0, 256], sizes = [16, 128], strides = [1, 1]} : vector<16x384xf32> to vector<16x128xf32>
    %6 = tpu.concatenate %3, %4, %5 in 0 : vector<16x128xf32>, vector<16x128xf32>, vector<16x128xf32> -> vector<48x128xf32>
    %c0_3 = arith.constant 0 : index
    %c0_4 = arith.constant 0 : index
    %7 = vector.load %arg2[%c0_3, %c0_4] : memref<16x48xf32, #tpu.memory_space<vmem>>, vector<16x48xf32>
    %cst_5 = arith.constant dense<0.000000e+00> : vector<16x128xf32>
    %8 = tpu.matmul %7, %6, %cst_5 {dimension_numbers = #tpu.dot_dimension_numbers<[1], [0], [0], [1], [0, 0, 1, 1], [], []>} : vector<16x48xf32>, vector<48x128xf32>, vector<16x128xf32> -> vector<16x128xf32>
    %c0_6 = arith.constant 0 : index
    %c0_7 = arith.constant 0 : index
    %9 = vector.load %arg3[%c0_6, %c0_7] : memref<16x128xf32, #tpu.memory_space<vmem>>, vector<16x128xf32>
    %10 = arith.addf %8, %9 : vector<16x128xf32>
    %cst_8 = arith.constant 0.000000e+00 : f32
    %11 = vector.broadcast %cst_8 : f32 to vector<16x128xf32>
    %12 = arith.maximumf %10, %11 : vector<16x128xf32>
    %13 = vector.extract_strided_slice %12 {offsets = [0, 0], sizes = [1, 32], strides = [1, 1]} : vector<16x128xf32> to vector<1x32xf32>
    %c0_9 = arith.constant 0 : index
    %c0_10 = arith.constant 0 : index
    %14 = vector.load %arg9[%c0_9, %c0_10] : memref<4x512xf32, #tpu.memory_space<vmem>>, vector<1x32xf32>
    tpu.vector_store %arg9[%c0_9, %c0_10], %13 {strides = array<i32>} : memref<4x512xf32, #tpu.memory_space<vmem>>, vector<1x32xf32>,
    %15 = vector.extract_strided_slice %12 {offsets = [1, 0], sizes = [1, 32], strides = [1, 1]} : vector<16x128xf32> to vector<1x32xf32>
    %c0_11 = arith.constant 0 : index
    %c32 = arith.constant 32 : index
    %16 = vector.load %arg9[%c0_11, %c32] : memref<4x512xf32, #tpu.memory_space<vmem>>, vector<1x32xf32>
    tpu.vector_store %arg9[%c0_11, %c32], %15 {strides = array<i32>} : memref<4x512xf32, #tpu.memory_space<vmem>>, vector<1x32xf32>,
    %17 = vector.extract_strided_slice %12 {offsets = [2, 0], sizes = [1, 32], strides = [1, 1]} : vector<16x128xf32> to vector<1x32xf32>
    %c0_12 = arith.constant 0 : index
    %c64 = arith.constant 64 : index
    %18 = vector.load %arg9[%c0_12, %c64] : memref<4x512xf32, #tpu.memory_space<vmem>>, vector<1x32xf32>
    tpu.vector_store %arg9[%c0_12, %c64], %17 {strides = array<i32>} : memref<4x512xf32, #tpu.memory_space<vmem>>, vector<1x32xf32>,
    %19 = vector.extract_strided_slice %12 {offsets = [3, 0], sizes = [1, 32], strides = [1, 1]} : vector<16x128xf32> to vector<1x32xf32>
    %c0_13 = arith.constant 0 : index
    %c96 = arith.constant 96 : index
    %20 = vector.load %arg9[%c0_13, %c96] : memref<4x512xf32, #tpu.memory_space<vmem>>, vector<1x32xf32>
    tpu.vector_store %arg9[%c0_13, %c96], %19 {strides = array<i32>} : memref<4x512xf32, #tpu.memory_space<vmem>>, vector<1x32xf32>,
    %21 = vector.extract_strided_slice %12 {offsets = [4, 0], sizes = [1, 32], strides = [1, 1]} : vector<16x128xf32> to vector<1x32xf32>
    %c0_14 = arith.constant 0 : index
    %c128 = arith.constant 128 : index
    %22 = vector.load %arg9[%c0_14, %c128] : memref<4x512xf32, #tpu.memory_space<vmem>>, vector<1x32xf32>
    tpu.vector_store %arg9[%c0_14, %c128], %21 {strides = array<i32>} : memref<4x512xf32, #tpu.memory_space<vmem>>, vector<1x32xf32>,
    %23 = vector.extract_strided_slice %12 {offsets = [5, 0], sizes = [1, 32], strides = [1, 1]} : vector<16x128xf32> to vector<1x32xf32>
    %c0_15 = arith.constant 0 : index
    %c160 = arith.constant 160 : index
    %24 = vector.load %arg9[%c0_15, %c160] : memref<4x512xf32, #tpu.memory_space<vmem>>, vector<1x32xf32>
    tpu.vector_store %arg9[%c0_15, %c160], %23 {strides = array<i32>} : memref<4x512xf32, #tpu.memory_space<vmem>>, vector<1x32xf32>,
    %25 = vector.extract_strided_slice %12 {offsets = [6, 0], sizes = [1, 32], strides = [1, 1]} : vector<16x128xf32> to vector<1x32xf32>
    %c0_16 = arith.constant 0 : index
    %c192 = arith.constant 192 : index
    %26 = vector.load %arg9[%c0_16, %c192] : memref<4x512xf32, #tpu.memory_space<vmem>>, vector<1x32xf32>
    tpu.vector_store %arg9[%c0_16, %c192], %25 {strides = array<i32>} : memref<4x512xf32, #tpu.memory_space<vmem>>, vector<1x32xf32>,
    %27 = vector.extract_strided_slice %12 {offsets = [7, 0], sizes = [1, 32], strides = [1, 1]} : vector<16x128xf32> to vector<1x32xf32>
    %c0_17 = arith.constant 0 : index
    %c224 = arith.constant 224 : index
    %28 = vector.load %arg9[%c0_17, %c224] : memref<4x512xf32, #tpu.memory_space<vmem>>, vector<1x32xf32>
    tpu.vector_store %arg9[%c0_17, %c224], %27 {strides = array<i32>} : memref<4x512xf32, #tpu.memory_space<vmem>>, vector<1x32xf32>,
    %29 = vector.extract_strided_slice %12 {offsets = [8, 0], sizes = [1, 32], strides = [1, 1]} : vector<16x128xf32> to vector<1x32xf32>
    %c0_18 = arith.constant 0 : index
    %c256 = arith.constant 256 : index
    %30 = vector.load %arg9[%c0_18, %c256] : memref<4x512xf32, #tpu.memory_space<vmem>>, vector<1x32xf32>
    tpu.vector_store %arg9[%c0_18, %c256], %29 {strides = array<i32>} : memref<4x512xf32, #tpu.memory_space<vmem>>, vector<1x32xf32>,
    %31 = vector.extract_strided_slice %12 {offsets = [9, 0], sizes = [1, 32], strides = [1, 1]} : vector<16x128xf32> to vector<1x32xf32>
    %c0_19 = arith.constant 0 : index
    %c288 = arith.constant 288 : index
    %32 = vector.load %arg9[%c0_19, %c288] : memref<4x512xf32, #tpu.memory_space<vmem>>, vector<1x32xf32>
    tpu.vector_store %arg9[%c0_19, %c288], %31 {strides = array<i32>} : memref<4x512xf32, #tpu.memory_space<vmem>>, vector<1x32xf32>,
    %33 = vector.extract_strided_slice %12 {offsets = [10, 0], sizes = [1, 32], strides = [1, 1]} : vector<16x128xf32> to vector<1x32xf32>
    %c0_20 = arith.constant 0 : index
    %c320 = arith.constant 320 : index
    %34 = vector.load %arg9[%c0_20, %c320] : memref<4x512xf32, #tpu.memory_space<vmem>>, vector<1x32xf32>
    tpu.vector_store %arg9[%c0_20, %c320], %33 {strides = array<i32>} : memref<4x512xf32, #tpu.memory_space<vmem>>, vector<1x32xf32>,
    %35 = vector.extract_strided_slice %12 {offsets = [11, 0], sizes = [1, 32], strides = [1, 1]} : vector<16x128xf32> to vector<1x32xf32>
    %c0_21 = arith.constant 0 : index
    %c352 = arith.constant 352 : index
    %36 = vector.load %arg9[%c0_21, %c352] : memref<4x512xf32, #tpu.memory_space<vmem>>, vector<1x32xf32>
    tpu.vector_store %arg9[%c0_21, %c352], %35 {strides = array<i32>} : memref<4x512xf32, #tpu.memory_space<vmem>>, vector<1x32xf32>,
    %37 = vector.extract_strided_slice %12 {offsets = [12, 0], sizes = [1, 32], strides = [1, 1]} : vector<16x128xf32> to vector<1x32xf32>
    %c0_22 = arith.constant 0 : index
    %c384 = arith.constant 384 : index
    %38 = vector.load %arg9[%c0_22, %c384] : memref<4x512xf32, #tpu.memory_space<vmem>>, vector<1x32xf32>
    tpu.vector_store %arg9[%c0_22, %c384], %37 {strides = array<i32>} : memref<4x512xf32, #tpu.memory_space<vmem>>, vector<1x32xf32>,
    %39 = vector.extract_strided_slice %12 {offsets = [13, 0], sizes = [1, 32], strides = [1, 1]} : vector<16x128xf32> to vector<1x32xf32>
    %c0_23 = arith.constant 0 : index
    %c416 = arith.constant 416 : index
    %40 = vector.load %arg9[%c0_23, %c416] : memref<4x512xf32, #tpu.memory_space<vmem>>, vector<1x32xf32>
    tpu.vector_store %arg9[%c0_23, %c416], %39 {strides = array<i32>} : memref<4x512xf32, #tpu.memory_space<vmem>>, vector<1x32xf32>,
    %41 = vector.extract_strided_slice %12 {offsets = [14, 0], sizes = [1, 32], strides = [1, 1]} : vector<16x128xf32> to vector<1x32xf32>
    %c0_24 = arith.constant 0 : index
    %c448 = arith.constant 448 : index
    %42 = vector.load %arg9[%c0_24, %c448] : memref<4x512xf32, #tpu.memory_space<vmem>>, vector<1x32xf32>
    tpu.vector_store %arg9[%c0_24, %c448], %41 {strides = array<i32>} : memref<4x512xf32, #tpu.memory_space<vmem>>, vector<1x32xf32>,
    %43 = vector.extract_strided_slice %12 {offsets = [15, 0], sizes = [1, 32], strides = [1, 1]} : vector<16x128xf32> to vector<1x32xf32>
    %c0_25 = arith.constant 0 : index
    %c480 = arith.constant 480 : index
    %44 = vector.load %arg9[%c0_25, %c480] : memref<4x512xf32, #tpu.memory_space<vmem>>, vector<1x32xf32>
    tpu.vector_store %arg9[%c0_25, %c480], %43 {strides = array<i32>} : memref<4x512xf32, #tpu.memory_space<vmem>>, vector<1x32xf32>,
    %45 = vector.extract_strided_slice %12 {offsets = [0, 32], sizes = [1, 32], strides = [1, 1]} : vector<16x128xf32> to vector<1x32xf32>
    %c1 = arith.constant 1 : index
    %c0_26 = arith.constant 0 : index
    %46 = vector.load %arg9[%c1, %c0_26] : memref<4x512xf32, #tpu.memory_space<vmem>>, vector<1x32xf32>
    tpu.vector_store %arg9[%c1, %c0_26], %45 {strides = array<i32>} : memref<4x512xf32, #tpu.memory_space<vmem>>, vector<1x32xf32>,
    %47 = vector.extract_strided_slice %12 {offsets = [1, 32], sizes = [1, 32], strides = [1, 1]} : vector<16x128xf32> to vector<1x32xf32>
    %c1_27 = arith.constant 1 : index
    %c32_28 = arith.constant 32 : index
    %48 = vector.load %arg9[%c1_27, %c32_28] : memref<4x512xf32, #tpu.memory_space<vmem>>, vector<1x32xf32>
    tpu.vector_store %arg9[%c1_27, %c32_28], %47 {strides = array<i32>} : memref<4x512xf32, #tpu.memory_space<vmem>>, vector<1x32xf32>,
    %49 = vector.extract_strided_slice %12 {offsets = [2, 32], sizes = [1, 32], strides = [1, 1]} : vector<16x128xf32> to vector<1x32xf32>
    %c1_29 = arith.constant 1 : index
    %c64_30 = arith.constant 64 : index
    %50 = vector.load %arg9[%c1_29, %c64_30] : memref<4x512xf32, #tpu.memory_space<vmem>>, vector<1x32xf32>
    tpu.vector_store %arg9[%c1_29, %c64_30], %49 {strides = array<i32>} : memref<4x512xf32, #tpu.memory_space<vmem>>, vector<1x32xf32>,
    %51 = vector.extract_strided_slice %12 {offsets = [3, 32], sizes = [1, 32], strides = [1, 1]} : vector<16x128xf32> to vector<1x32xf32>
    %c1_31 = arith.constant 1 : index
    %c96_32 = arith.constant 96 : index
    %52 = vector.load %arg9[%c1_31, %c96_32] : memref<4x512xf32, #tpu.memory_space<vmem>>, vector<1x32xf32>
    tpu.vector_store %arg9[%c1_31, %c96_32], %51 {strides = array<i32>} : memref<4x512xf32, #tpu.memory_space<vmem>>, vector<1x32xf32>,
    %53 = vector.extract_strided_slice %12 {offsets = [4, 32], sizes = [1, 32], strides = [1, 1]} : vector<16x128xf32> to vector<1x32xf32>
    %c1_33 = arith.constant 1 : index
    %c128_34 = arith.constant 128 : index
    %54 = vector.load %arg9[%c1_33, %c128_34] : memref<4x512xf32, #tpu.memory_space<vmem>>, vector<1x32xf32>
    tpu.vector_store %arg9[%c1_33, %c128_34], %53 {strides = array<i32>} : memref<4x512xf32, #tpu.memory_space<vmem>>, vector<1x32xf32>,
    %55 = vector.extract_strided_slice %12 {offsets = [5, 32], sizes = [1, 32], strides = [1, 1]} : vector<16x128xf32> to vector<1x32xf32>
    %c1_35 = arith.constant 1 : index
    %c160_36 = arith.constant 160 : index
    %56 = vector.load %arg9[%c1_35, %c160_36] : memref<4x512xf32, #tpu.memory_space<vmem>>, vector<1x32xf32>
    tpu.vector_store %arg9[%c1_35, %c160_36], %55 {strides = array<i32>} : memref<4x512xf32, #tpu.memory_space<vmem>>, vector<1x32xf32>,
    %57 = vector.extract_strided_slice %12 {offsets = [6, 32], sizes = [1, 32], strides = [1, 1]} : vector<16x128xf32> to vector<1x32xf32>
    %c1_37 = arith.constant 1 : index
    %c192_38 = arith.constant 192 : index
    %58 = vector.load %arg9[%c1_37, %c192_38] : memref<4x512xf32, #tpu.memory_space<vmem>>, vector<1x32xf32>
    tpu.vector_store %arg9[%c1_37, %c192_38], %57 {strides = array<i32>} : memref<4x512xf32, #tpu.memory_space<vmem>>, vector<1x32xf32>,
    %59 = vector.extract_strided_slice %12 {offsets = [7, 32], sizes = [1, 32], strides = [1, 1]} : vector<16x128xf32> to vector<1x32xf32>
    %c1_39 = arith.constant 1 : index
    %c224_40 = arith.constant 224 : index
    %60 = vector.load %arg9[%c1_39, %c224_40] : memref<4x512xf32, #tpu.memory_space<vmem>>, vector<1x32xf32>
    tpu.vector_store %arg9[%c1_39, %c224_40], %59 {strides = array<i32>} : memref<4x512xf32, #tpu.memory_space<vmem>>, vector<1x32xf32>,
    %61 = vector.extract_strided_slice %12 {offsets = [8, 32], sizes = [1, 32], strides = [1, 1]} : vector<16x128xf32> to vector<1x32xf32>
    %c1_41 = arith.constant 1 : index
    %c256_42 = arith.constant 256 : index
    %62 = vector.load %arg9[%c1_41, %c256_42] : memref<4x512xf32, #tpu.memory_space<vmem>>, vector<1x32xf32>
    tpu.vector_store %arg9[%c1_41, %c256_42], %61 {strides = array<i32>} : memref<4x512xf32, #tpu.memory_space<vmem>>, vector<1x32xf32>,
    %63 = vector.extract_strided_slice %12 {offsets = [9, 32], sizes = [1, 32], strides = [1, 1]} : vector<16x128xf32> to vector<1x32xf32>
    %c1_43 = arith.constant 1 : index
    %c288_44 = arith.constant 288 : index
    %64 = vector.load %arg9[%c1_43, %c288_44] : memref<4x512xf32, #tpu.memory_space<vmem>>, vector<1x32xf32>
    tpu.vector_store %arg9[%c1_43, %c288_44], %63 {strides = array<i32>} : memref<4x512xf32, #tpu.memory_space<vmem>>, vector<1x32xf32>,
    %65 = vector.extract_strided_slice %12 {offsets = [10, 32], sizes = [1, 32], strides = [1, 1]} : vector<16x128xf32> to vector<1x32xf32>
    %c1_45 = arith.constant 1 : index
    %c320_46 = arith.constant 320 : index
    %66 = vector.load %arg9[%c1_45, %c320_46] : memref<4x512xf32, #tpu.memory_space<vmem>>, vector<1x32xf32>
    tpu.vector_store %arg9[%c1_45, %c320_46], %65 {strides = array<i32>} : memref<4x512xf32, #tpu.memory_space<vmem>>, vector<1x32xf32>,
    %67 = vector.extract_strided_slice %12 {offsets = [11, 32], sizes = [1, 32], strides = [1, 1]} : vector<16x128xf32> to vector<1x32xf32>
    %c1_47 = arith.constant 1 : index
    %c352_48 = arith.constant 352 : index
    %68 = vector.load %arg9[%c1_47, %c352_48] : memref<4x512xf32, #tpu.memory_space<vmem>>, vector<1x32xf32>
    tpu.vector_store %arg9[%c1_47, %c352_48], %67 {strides = array<i32>} : memref<4x512xf32, #tpu.memory_space<vmem>>, vector<1x32xf32>,
    %69 = vector.extract_strided_slice %12 {offsets = [12, 32], sizes = [1, 32], strides = [1, 1]} : vector<16x128xf32> to vector<1x32xf32>
    %c1_49 = arith.constant 1 : index
    %c384_50 = arith.constant 384 : index
    %70 = vector.load %arg9[%c1_49, %c384_50] : memref<4x512xf32, #tpu.memory_space<vmem>>, vector<1x32xf32>
    tpu.vector_store %arg9[%c1_49, %c384_50], %69 {strides = array<i32>} : memref<4x512xf32, #tpu.memory_space<vmem>>, vector<1x32xf32>,
    %71 = vector.extract_strided_slice %12 {offsets = [13, 32], sizes = [1, 32], strides = [1, 1]} : vector<16x128xf32> to vector<1x32xf32>
    %c1_51 = arith.constant 1 : index
    %c416_52 = arith.constant 416 : index
    %72 = vector.load %arg9[%c1_51, %c416_52] : memref<4x512xf32, #tpu.memory_space<vmem>>, vector<1x32xf32>
    tpu.vector_store %arg9[%c1_51, %c416_52], %71 {strides = array<i32>} : memref<4x512xf32, #tpu.memory_space<vmem>>, vector<1x32xf32>,
    %73 = vector.extract_strided_slice %12 {offsets = [14, 32], sizes = [1, 32], strides = [1, 1]} : vector<16x128xf32> to vector<1x32xf32>
    %c1_53 = arith.constant 1 : index
    %c448_54 = arith.constant 448 : index
    %74 = vector.load %arg9[%c1_53, %c448_54] : memref<4x512xf32, #tpu.memory_space<vmem>>, vector<1x32xf32>
    tpu.vector_store %arg9[%c1_53, %c448_54], %73 {strides = array<i32>} : memref<4x512xf32, #tpu.memory_space<vmem>>, vector<1x32xf32>,
    %75 = vector.extract_strided_slice %12 {offsets = [15, 32], sizes = [1, 32], strides = [1, 1]} : vector<16x128xf32> to vector<1x32xf32>
    %c1_55 = arith.constant 1 : index
    %c480_56 = arith.constant 480 : index
    %76 = vector.load %arg9[%c1_55, %c480_56] : memref<4x512xf32, #tpu.memory_space<vmem>>, vector<1x32xf32>
    tpu.vector_store %arg9[%c1_55, %c480_56], %75 {strides = array<i32>} : memref<4x512xf32, #tpu.memory_space<vmem>>, vector<1x32xf32>,
    %77 = vector.extract_strided_slice %12 {offsets = [0, 64], sizes = [1, 32], strides = [1, 1]} : vector<16x128xf32> to vector<1x32xf32>
    %c2 = arith.constant 2 : index
    %c0_57 = arith.constant 0 : index
    %78 = vector.load %arg9[%c2, %c0_57] : memref<4x512xf32, #tpu.memory_space<vmem>>, vector<1x32xf32>
    tpu.vector_store %arg9[%c2, %c0_57], %77 {strides = array<i32>} : memref<4x512xf32, #tpu.memory_space<vmem>>, vector<1x32xf32>,
    %79 = vector.extract_strided_slice %12 {offsets = [1, 64], sizes = [1, 32], strides = [1, 1]} : vector<16x128xf32> to vector<1x32xf32>
    %c2_58 = arith.constant 2 : index
    %c32_59 = arith.constant 32 : index
    %80 = vector.load %arg9[%c2_58, %c32_59] : memref<4x512xf32, #tpu.memory_space<vmem>>, vector<1x32xf32>
    tpu.vector_store %arg9[%c2_58, %c32_59], %79 {strides = array<i32>} : memref<4x512xf32, #tpu.memory_space<vmem>>, vector<1x32xf32>,
    %81 = vector.extract_strided_slice %12 {offsets = [2, 64], sizes = [1, 32], strides = [1, 1]} : vector<16x128xf32> to vector<1x32xf32>
    %c2_60 = arith.constant 2 : index
    %c64_61 = arith.constant 64 : index
    %82 = vector.load %arg9[%c2_60, %c64_61] : memref<4x512xf32, #tpu.memory_space<vmem>>, vector<1x32xf32>
    tpu.vector_store %arg9[%c2_60, %c64_61], %81 {strides = array<i32>} : memref<4x512xf32, #tpu.memory_space<vmem>>, vector<1x32xf32>,
    %83 = vector.extract_strided_slice %12 {offsets = [3, 64], sizes = [1, 32], strides = [1, 1]} : vector<16x128xf32> to vector<1x32xf32>
    %c2_62 = arith.constant 2 : index
    %c96_63 = arith.constant 96 : index
    %84 = vector.load %arg9[%c2_62, %c96_63] : memref<4x512xf32, #tpu.memory_space<vmem>>, vector<1x32xf32>
    tpu.vector_store %arg9[%c2_62, %c96_63], %83 {strides = array<i32>} : memref<4x512xf32, #tpu.memory_space<vmem>>, vector<1x32xf32>,
    %85 = vector.extract_strided_slice %12 {offsets = [4, 64], sizes = [1, 32], strides = [1, 1]} : vector<16x128xf32> to vector<1x32xf32>
    %c2_64 = arith.constant 2 : index
    %c128_65 = arith.constant 128 : index
    %86 = vector.load %arg9[%c2_64, %c128_65] : memref<4x512xf32, #tpu.memory_space<vmem>>, vector<1x32xf32>
    tpu.vector_store %arg9[%c2_64, %c128_65], %85 {strides = array<i32>} : memref<4x512xf32, #tpu.memory_space<vmem>>, vector<1x32xf32>,
    %87 = vector.extract_strided_slice %12 {offsets = [5, 64], sizes = [1, 32], strides = [1, 1]} : vector<16x128xf32> to vector<1x32xf32>
    %c2_66 = arith.constant 2 : index
    %c160_67 = arith.constant 160 : index
    %88 = vector.load %arg9[%c2_66, %c160_67] : memref<4x512xf32, #tpu.memory_space<vmem>>, vector<1x32xf32>
    tpu.vector_store %arg9[%c2_66, %c160_67], %87 {strides = array<i32>} : memref<4x512xf32, #tpu.memory_space<vmem>>, vector<1x32xf32>,
    %89 = vector.extract_strided_slice %12 {offsets = [6, 64], sizes = [1, 32], strides = [1, 1]} : vector<16x128xf32> to vector<1x32xf32>
    %c2_68 = arith.constant 2 : index
    %c192_69 = arith.constant 192 : index
    %90 = vector.load %arg9[%c2_68, %c192_69] : memref<4x512xf32, #tpu.memory_space<vmem>>, vector<1x32xf32>
    tpu.vector_store %arg9[%c2_68, %c192_69], %89 {strides = array<i32>} : memref<4x512xf32, #tpu.memory_space<vmem>>, vector<1x32xf32>,
    %91 = vector.extract_strided_slice %12 {offsets = [7, 64], sizes = [1, 32], strides = [1, 1]} : vector<16x128xf32> to vector<1x32xf32>
    %c2_70 = arith.constant 2 : index
    %c224_71 = arith.constant 224 : index
    %92 = vector.load %arg9[%c2_70, %c224_71] : memref<4x512xf32, #tpu.memory_space<vmem>>, vector<1x32xf32>
    tpu.vector_store %arg9[%c2_70, %c224_71], %91 {strides = array<i32>} : memref<4x512xf32, #tpu.memory_space<vmem>>, vector<1x32xf32>,
    %93 = vector.extract_strided_slice %12 {offsets = [8, 64], sizes = [1, 32], strides = [1, 1]} : vector<16x128xf32> to vector<1x32xf32>
    %c2_72 = arith.constant 2 : index
    %c256_73 = arith.constant 256 : index
    %94 = vector.load %arg9[%c2_72, %c256_73] : memref<4x512xf32, #tpu.memory_space<vmem>>, vector<1x32xf32>
    tpu.vector_store %arg9[%c2_72, %c256_73], %93 {strides = array<i32>} : memref<4x512xf32, #tpu.memory_space<vmem>>, vector<1x32xf32>,
    %95 = vector.extract_strided_slice %12 {offsets = [9, 64], sizes = [1, 32], strides = [1, 1]} : vector<16x128xf32> to vector<1x32xf32>
    %c2_74 = arith.constant 2 : index
    %c288_75 = arith.constant 288 : index
    %96 = vector.load %arg9[%c2_74, %c288_75] : memref<4x512xf32, #tpu.memory_space<vmem>>, vector<1x32xf32>
    tpu.vector_store %arg9[%c2_74, %c288_75], %95 {strides = array<i32>} : memref<4x512xf32, #tpu.memory_space<vmem>>, vector<1x32xf32>,
    %97 = vector.extract_strided_slice %12 {offsets = [10, 64], sizes = [1, 32], strides = [1, 1]} : vector<16x128xf32> to vector<1x32xf32>
    %c2_76 = arith.constant 2 : index
    %c320_77 = arith.constant 320 : index
    %98 = vector.load %arg9[%c2_76, %c320_77] : memref<4x512xf32, #tpu.memory_space<vmem>>, vector<1x32xf32>
    tpu.vector_store %arg9[%c2_76, %c320_77], %97 {strides = array<i32>} : memref<4x512xf32, #tpu.memory_space<vmem>>, vector<1x32xf32>,
    %99 = vector.extract_strided_slice %12 {offsets = [11, 64], sizes = [1, 32], strides = [1, 1]} : vector<16x128xf32> to vector<1x32xf32>
    %c2_78 = arith.constant 2 : index
    %c352_79 = arith.constant 352 : index
    %100 = vector.load %arg9[%c2_78, %c352_79] : memref<4x512xf32, #tpu.memory_space<vmem>>, vector<1x32xf32>
    tpu.vector_store %arg9[%c2_78, %c352_79], %99 {strides = array<i32>} : memref<4x512xf32, #tpu.memory_space<vmem>>, vector<1x32xf32>,
    %101 = vector.extract_strided_slice %12 {offsets = [12, 64], sizes = [1, 32], strides = [1, 1]} : vector<16x128xf32> to vector<1x32xf32>
    %c2_80 = arith.constant 2 : index
    %c384_81 = arith.constant 384 : index
    %102 = vector.load %arg9[%c2_80, %c384_81] : memref<4x512xf32, #tpu.memory_space<vmem>>, vector<1x32xf32>
    tpu.vector_store %arg9[%c2_80, %c384_81], %101 {strides = array<i32>} : memref<4x512xf32, #tpu.memory_space<vmem>>, vector<1x32xf32>,
    %103 = vector.extract_strided_slice %12 {offsets = [13, 64], sizes = [1, 32], strides = [1, 1]} : vector<16x128xf32> to vector<1x32xf32>
    %c2_82 = arith.constant 2 : index
    %c416_83 = arith.constant 416 : index
    %104 = vector.load %arg9[%c2_82, %c416_83] : memref<4x512xf32, #tpu.memory_space<vmem>>, vector<1x32xf32>
    tpu.vector_store %arg9[%c2_82, %c416_83], %103 {strides = array<i32>} : memref<4x512xf32, #tpu.memory_space<vmem>>, vector<1x32xf32>,
    %105 = vector.extract_strided_slice %12 {offsets = [14, 64], sizes = [1, 32], strides = [1, 1]} : vector<16x128xf32> to vector<1x32xf32>
    %c2_84 = arith.constant 2 : index
    %c448_85 = arith.constant 448 : index
    %106 = vector.load %arg9[%c2_84, %c448_85] : memref<4x512xf32, #tpu.memory_space<vmem>>, vector<1x32xf32>
    tpu.vector_store %arg9[%c2_84, %c448_85], %105 {strides = array<i32>} : memref<4x512xf32, #tpu.memory_space<vmem>>, vector<1x32xf32>,
    %107 = vector.extract_strided_slice %12 {offsets = [15, 64], sizes = [1, 32], strides = [1, 1]} : vector<16x128xf32> to vector<1x32xf32>
    %c2_86 = arith.constant 2 : index
    %c480_87 = arith.constant 480 : index
    %108 = vector.load %arg9[%c2_86, %c480_87] : memref<4x512xf32, #tpu.memory_space<vmem>>, vector<1x32xf32>
    tpu.vector_store %arg9[%c2_86, %c480_87], %107 {strides = array<i32>} : memref<4x512xf32, #tpu.memory_space<vmem>>, vector<1x32xf32>,
    %109 = vector.extract_strided_slice %12 {offsets = [0, 96], sizes = [1, 32], strides = [1, 1]} : vector<16x128xf32> to vector<1x32xf32>
    %c3 = arith.constant 3 : index
    %c0_88 = arith.constant 0 : index
    %110 = vector.load %arg9[%c3, %c0_88] : memref<4x512xf32, #tpu.memory_space<vmem>>, vector<1x32xf32>
    tpu.vector_store %arg9[%c3, %c0_88], %109 {strides = array<i32>} : memref<4x512xf32, #tpu.memory_space<vmem>>, vector<1x32xf32>,
    %111 = vector.extract_strided_slice %12 {offsets = [1, 96], sizes = [1, 32], strides = [1, 1]} : vector<16x128xf32> to vector<1x32xf32>
    %c3_89 = arith.constant 3 : index
    %c32_90 = arith.constant 32 : index
    %112 = vector.load %arg9[%c3_89, %c32_90] : memref<4x512xf32, #tpu.memory_space<vmem>>, vector<1x32xf32>
    tpu.vector_store %arg9[%c3_89, %c32_90], %111 {strides = array<i32>} : memref<4x512xf32, #tpu.memory_space<vmem>>, vector<1x32xf32>,
    %113 = vector.extract_strided_slice %12 {offsets = [2, 96], sizes = [1, 32], strides = [1, 1]} : vector<16x128xf32> to vector<1x32xf32>
    %c3_91 = arith.constant 3 : index
    %c64_92 = arith.constant 64 : index
    %114 = vector.load %arg9[%c3_91, %c64_92] : memref<4x512xf32, #tpu.memory_space<vmem>>, vector<1x32xf32>
    tpu.vector_store %arg9[%c3_91, %c64_92], %113 {strides = array<i32>} : memref<4x512xf32, #tpu.memory_space<vmem>>, vector<1x32xf32>,
    %115 = vector.extract_strided_slice %12 {offsets = [3, 96], sizes = [1, 32], strides = [1, 1]} : vector<16x128xf32> to vector<1x32xf32>
    %c3_93 = arith.constant 3 : index
    %c96_94 = arith.constant 96 : index
    %116 = vector.load %arg9[%c3_93, %c96_94] : memref<4x512xf32, #tpu.memory_space<vmem>>, vector<1x32xf32>
    tpu.vector_store %arg9[%c3_93, %c96_94], %115 {strides = array<i32>} : memref<4x512xf32, #tpu.memory_space<vmem>>, vector<1x32xf32>,
    %117 = vector.extract_strided_slice %12 {offsets = [4, 96], sizes = [1, 32], strides = [1, 1]} : vector<16x128xf32> to vector<1x32xf32>
    %c3_95 = arith.constant 3 : index
    %c128_96 = arith.constant 128 : index
    %118 = vector.load %arg9[%c3_95, %c128_96] : memref<4x512xf32, #tpu.memory_space<vmem>>, vector<1x32xf32>
    tpu.vector_store %arg9[%c3_95, %c128_96], %117 {strides = array<i32>} : memref<4x512xf32, #tpu.memory_space<vmem>>, vector<1x32xf32>,
    %119 = vector.extract_strided_slice %12 {offsets = [5, 96], sizes = [1, 32], strides = [1, 1]} : vector<16x128xf32> to vector<1x32xf32>
    %c3_97 = arith.constant 3 : index
    %c160_98 = arith.constant 160 : index
    %120 = vector.load %arg9[%c3_97, %c160_98] : memref<4x512xf32, #tpu.memory_space<vmem>>, vector<1x32xf32>
    tpu.vector_store %arg9[%c3_97, %c160_98], %119 {strides = array<i32>} : memref<4x512xf32, #tpu.memory_space<vmem>>, vector<1x32xf32>,
    %121 = vector.extract_strided_slice %12 {offsets = [6, 96], sizes = [1, 32], strides = [1, 1]} : vector<16x128xf32> to vector<1x32xf32>
    %c3_99 = arith.constant 3 : index
    %c192_100 = arith.constant 192 : index
    %122 = vector.load %arg9[%c3_99, %c192_100] : memref<4x512xf32, #tpu.memory_space<vmem>>, vector<1x32xf32>
    tpu.vector_store %arg9[%c3_99, %c192_100], %121 {strides = array<i32>} : memref<4x512xf32, #tpu.memory_space<vmem>>, vector<1x32xf32>,
    %123 = vector.extract_strided_slice %12 {offsets = [7, 96], sizes = [1, 32], strides = [1, 1]} : vector<16x128xf32> to vector<1x32xf32>
    %c3_101 = arith.constant 3 : index
    %c224_102 = arith.constant 224 : index
    %124 = vector.load %arg9[%c3_101, %c224_102] : memref<4x512xf32, #tpu.memory_space<vmem>>, vector<1x32xf32>
    tpu.vector_store %arg9[%c3_101, %c224_102], %123 {strides = array<i32>} : memref<4x512xf32, #tpu.memory_space<vmem>>, vector<1x32xf32>,
    %125 = vector.extract_strided_slice %12 {offsets = [8, 96], sizes = [1, 32], strides = [1, 1]} : vector<16x128xf32> to vector<1x32xf32>
    %c3_103 = arith.constant 3 : index
    %c256_104 = arith.constant 256 : index
    %126 = vector.load %arg9[%c3_103, %c256_104] : memref<4x512xf32, #tpu.memory_space<vmem>>, vector<1x32xf32>
    tpu.vector_store %arg9[%c3_103, %c256_104], %125 {strides = array<i32>} : memref<4x512xf32, #tpu.memory_space<vmem>>, vector<1x32xf32>,
    %127 = vector.extract_strided_slice %12 {offsets = [9, 96], sizes = [1, 32], strides = [1, 1]} : vector<16x128xf32> to vector<1x32xf32>
    %c3_105 = arith.constant 3 : index
    %c288_106 = arith.constant 288 : index
    %128 = vector.load %arg9[%c3_105, %c288_106] : memref<4x512xf32, #tpu.memory_space<vmem>>, vector<1x32xf32>
    tpu.vector_store %arg9[%c3_105, %c288_106], %127 {strides = array<i32>} : memref<4x512xf32, #tpu.memory_space<vmem>>, vector<1x32xf32>,
    %129 = vector.extract_strided_slice %12 {offsets = [10, 96], sizes = [1, 32], strides = [1, 1]} : vector<16x128xf32> to vector<1x32xf32>
    %c3_107 = arith.constant 3 : index
    %c320_108 = arith.constant 320 : index
    %130 = vector.load %arg9[%c3_107, %c320_108] : memref<4x512xf32, #tpu.memory_space<vmem>>, vector<1x32xf32>
    tpu.vector_store %arg9[%c3_107, %c320_108], %129 {strides = array<i32>} : memref<4x512xf32, #tpu.memory_space<vmem>>, vector<1x32xf32>,
    %131 = vector.extract_strided_slice %12 {offsets = [11, 96], sizes = [1, 32], strides = [1, 1]} : vector<16x128xf32> to vector<1x32xf32>
    %c3_109 = arith.constant 3 : index
    %c352_110 = arith.constant 352 : index
    %132 = vector.load %arg9[%c3_109, %c352_110] : memref<4x512xf32, #tpu.memory_space<vmem>>, vector<1x32xf32>
    tpu.vector_store %arg9[%c3_109, %c352_110], %131 {strides = array<i32>} : memref<4x512xf32, #tpu.memory_space<vmem>>, vector<1x32xf32>,
    %133 = vector.extract_strided_slice %12 {offsets = [12, 96], sizes = [1, 32], strides = [1, 1]} : vector<16x128xf32> to vector<1x32xf32>
    %c3_111 = arith.constant 3 : index
    %c384_112 = arith.constant 384 : index
    %134 = vector.load %arg9[%c3_111, %c384_112] : memref<4x512xf32, #tpu.memory_space<vmem>>, vector<1x32xf32>
    tpu.vector_store %arg9[%c3_111, %c384_112], %133 {strides = array<i32>} : memref<4x512xf32, #tpu.memory_space<vmem>>, vector<1x32xf32>,
    %135 = vector.extract_strided_slice %12 {offsets = [13, 96], sizes = [1, 32], strides = [1, 1]} : vector<16x128xf32> to vector<1x32xf32>
    %c3_113 = arith.constant 3 : index
    %c416_114 = arith.constant 416 : index
    %136 = vector.load %arg9[%c3_113, %c416_114] : memref<4x512xf32, #tpu.memory_space<vmem>>, vector<1x32xf32>
    tpu.vector_store %arg9[%c3_113, %c416_114], %135 {strides = array<i32>} : memref<4x512xf32, #tpu.memory_space<vmem>>, vector<1x32xf32>,
    %137 = vector.extract_strided_slice %12 {offsets = [14, 96], sizes = [1, 32], strides = [1, 1]} : vector<16x128xf32> to vector<1x32xf32>
    %c3_115 = arith.constant 3 : index
    %c448_116 = arith.constant 448 : index
    %138 = vector.load %arg9[%c3_115, %c448_116] : memref<4x512xf32, #tpu.memory_space<vmem>>, vector<1x32xf32>
    tpu.vector_store %arg9[%c3_115, %c448_116], %137 {strides = array<i32>} : memref<4x512xf32, #tpu.memory_space<vmem>>, vector<1x32xf32>,
    %139 = vector.extract_strided_slice %12 {offsets = [15, 96], sizes = [1, 32], strides = [1, 1]} : vector<16x128xf32> to vector<1x32xf32>
    %c3_117 = arith.constant 3 : index
    %c480_118 = arith.constant 480 : index
    %140 = vector.load %arg9[%c3_117, %c480_118] : memref<4x512xf32, #tpu.memory_space<vmem>>, vector<1x32xf32>
    tpu.vector_store %arg9[%c3_117, %c480_118], %139 {strides = array<i32>} : memref<4x512xf32, #tpu.memory_space<vmem>>, vector<1x32xf32>,
    %c0_119 = arith.constant 0 : index
    %c0_120 = arith.constant 0 : index
    %141 = vector.load %arg9[%c0_119, %c0_120] : memref<4x512xf32, #tpu.memory_space<vmem>>, vector<4x512xf32>
    %c0_121 = arith.constant 0 : index
    %c0_122 = arith.constant 0 : index
    %142 = vector.load %arg4[%c0_121, %c0_122] : memref<512x64xf32, #tpu.memory_space<vmem>>, vector<512x64xf32>
    %cst_123 = arith.constant dense<0.000000e+00> : vector<4x64xf32>
    %143 = tpu.matmul %141, %142, %cst_123 {dimension_numbers = #tpu.dot_dimension_numbers<[1], [0], [0], [1], [0, 0, 1, 1], [], []>} : vector<4x512xf32>, vector<512x64xf32>, vector<4x64xf32> -> vector<4x64xf32>
    %c0_124 = arith.constant 0 : index
    %c0_125 = arith.constant 0 : index
    %144 = vector.load %arg5[%c0_124, %c0_125] : memref<1x64xf32, #tpu.memory_space<vmem>>, vector<1x64xf32>
    %145 = vector.broadcast %144 : vector<1x64xf32> to vector<4x64xf32>
    %146 = arith.addf %143, %145 : vector<4x64xf32>
    %cst_126 = arith.constant 0.000000e+00 : f32
    %147 = vector.broadcast %cst_126 : f32 to vector<4x64xf32>
    %148 = arith.maximumf %146, %147 : vector<4x64xf32>
    %c0_127 = arith.constant 0 : index
    %c0_128 = arith.constant 0 : index
    %149 = vector.load %arg6[%c0_127, %c0_128] : memref<64x128xf32, #tpu.memory_space<vmem>>, vector<64x128xf32>
    %cst_129 = arith.constant dense<0.000000e+00> : vector<4x128xf32>
    %150 = tpu.matmul %148, %149, %cst_129 {dimension_numbers = #tpu.dot_dimension_numbers<[1], [0], [0], [1], [0, 0, 1, 1], [], []>} : vector<4x64xf32>, vector<64x128xf32>, vector<4x128xf32> -> vector<4x128xf32>
    %c0_130 = arith.constant 0 : index
    %c0_131 = arith.constant 0 : index
    %151 = vector.load %arg7[%c0_130, %c0_131] : memref<1x128xf32, #tpu.memory_space<vmem>>, vector<1x128xf32>
    %152 = vector.broadcast %151 : vector<1x128xf32> to vector<4x128xf32>
    %153 = arith.addf %150, %152 : vector<4x128xf32>
    %c0_132 = arith.constant 0 : index
    %c0_133 = arith.constant 0 : index
    %154 = vector.load %arg8[%c0_132, %c0_133] : memref<4x128xf32, #tpu.memory_space<vmem>>, vector<4x128xf32>
    tpu.vector_store %arg8[%c0_132, %c0_133], %153 {strides = array<i32>} : memref<4x128xf32, #tpu.memory_space<vmem>>, vector<4x128xf32>,
    return
  }
}

</mosaic_0001>

<llo_original>
// kernel: tile.9
$region0: #{tile.9}
  %s0 = inlined_call_operand.vmem [shape: f32[16,4,32], index: 0, kind: input, shape index: {}]
  %s1 = inlined_call_operand.vmem [shape: f32[16,128], index: 1, kind: output, shape index: {}]
  $region1: #{tile.9} parent=0
    #allocation0 [shape = 'u8[65536]{0}', space=vmem, size = 0x10000, scoped, tag = 'scoped mem for input reshape']
    %s3 = sshllo.u32 0, 4
    %s4 = smul.addr 4, 15
    %s5 = scalar_lea.vmem %s0, %s4
    %v6 = vld [vmem:[%s5] sm:%s3]
    %s7 = scalar_lea.vmem [#allocation0], 120
    %8 = vst [vmem:[%s7] sm:%s3] %v6
    %s9 = smul.addr 4, 14
    %s10 = scalar_lea.vmem %s0, %s9
    %v11 = vld [vmem:[%s10] sm:%s3]
    %s12 = scalar_lea.vmem [#allocation0], 112
    %13 = vst [vmem:[%s12] sm:%s3] %v11
    %s14 = smul.addr 4, 13
    %s15 = scalar_lea.vmem %s0, %s14
    %v16 = vld [vmem:[%s15] sm:%s3]
    %s17 = scalar_lea.vmem [#allocation0], 104
    %18 = vst [vmem:[%s17] sm:%s3] %v16
    %s19 = smul.addr 4, 12
    %s20 = scalar_lea.vmem %s0, %s19
    %v21 = vld [vmem:[%s20] sm:%s3]
    %s22 = scalar_lea.vmem [#allocation0], 96
    %23 = vst [vmem:[%s22] sm:%s3] %v21
    %s24 = smul.addr 4, 11
    %s25 = scalar_lea.vmem %s0, %s24
    %v26 = vld [vmem:[%s25] sm:%s3]
    %s27 = scalar_lea.vmem [#allocation0], 88
    %28 = vst [vmem:[%s27] sm:%s3] %v26
    %s29 = smul.addr 4, 10
    %s30 = scalar_lea.vmem %s0, %s29
    %v31 = vld [vmem:[%s30] sm:%s3]
    %s32 = scalar_lea.vmem [#allocation0], 80
    %33 = vst [vmem:[%s32] sm:%s3] %v31
    %s34 = smul.addr 4, 9
    %s35 = scalar_lea.vmem %s0, %s34
    %v36 = vld [vmem:[%s35] sm:%s3]
    %s37 = scalar_lea.vmem [#allocation0], 72
    %38 = vst [vmem:[%s37] sm:%s3] %v36
    %s39 = smul.addr 4, 8
    %s40 = scalar_lea.vmem %s0, %s39
    %v41 = vld [vmem:[%s40] sm:%s3]
    %s42 = scalar_lea.vmem [#allocation0], 64
    %43 = vst [vmem:[%s42] sm:%s3] %v41
    %s44 = smul.addr 4, 7
    %s45 = scalar_lea.vmem %s0, %s44
    %v46 = vld [vmem:[%s45] sm:%s3]
    %s47 = scalar_lea.vmem [#allocation0], 56
    %48 = vst [vmem:[%s47] sm:%s3] %v46
    %s49 = smul.addr 4, 6
    %s50 = scalar_lea.vmem %s0, %s49
    %v51 = vld [vmem:[%s50] sm:%s3]
    %s52 = scalar_lea.vmem [#allocation0], 48
    %53 = vst [vmem:[%s52] sm:%s3] %v51
    %s54 = smul.addr 4, 5
    %s55 = scalar_lea.vmem %s0, %s54
    %v56 = vld [vmem:[%s55] sm:%s3]
    %s57 = scalar_lea.vmem [#allocation0], 40
    %58 = vst [vmem:[%s57] sm:%s3] %v56
    %s59 = smul.addr 4, 4
    %s60 = scalar_lea.vmem %s0, %s59
    %v61 = vld [vmem:[%s60] sm:%s3]
    %s62 = scalar_lea.vmem [#allocation0], 32
    %63 = vst [vmem:[%s62] sm:%s3] %v61
    %s64 = smul.addr 4, 3
    %s65 = scalar_lea.vmem %s0, %s64
    %v66 = vld [vmem:[%s65] sm:%s3]
    %s67 = scalar_lea.vmem [#allocation0], 24
    %68 = vst [vmem:[%s67] sm:%s3] %v66
    %s69 = smul.addr 4, 2
    %s70 = scalar_lea.vmem %s0, %s69
    %v71 = vld [vmem:[%s70] sm:%s3]
    %s72 = scalar_lea.vmem [#allocation0], 16
    %73 = vst [vmem:[%s72] sm:%s3] %v71
    %s74 = scalar_lea.vmem %s0, 4
    %v75 = vld [vmem:[%s74] sm:%s3]
    %s76 = scalar_lea.vmem [#allocation0], 8
    %77 = vst [vmem:[%s76] sm:%s3] %v75
    %v78 = vld [vmem:[%s0] sm:%s3]
    %79 = vst [vmem:[#allocation0] sm:%s3] %v78
    %v80 = vld [vmem:[#allocation0] ss:$8 sm:$0xf]
    %v81 = vld [vmem:[#allocation0] ss:$8 sm:$0xf0]
    %vm82 = vcmask 1047556
    %v83 = vsel %vm82, %v81, %v80
    %vm84 = vcmask 261120
    %85 = vst.msk [vmem:[%s1] sm:$0xff] %vm84, %v83
    %s86 = scalar_lea.vmem [#allocation0], 64
    %v87 = vld [vmem:[%s86] ss:$8 sm:$0xf]
    %s88 = scalar_lea.vmem [#allocation0], 64
    %v89 = vld [vmem:[%s88] ss:$8 sm:$0xf0]
    %vm90 = vcmask 1047556
    %v91 = vsel %vm90, %v89, %v87
    %vm92 = vcmask 261120
    %s93 = scalar_lea.vmem %s1, 8
    %94 = vst.msk [vmem:[%s93] sm:$0xff] %vm92, %v91
    %s95 = scalar_lea.vmem [#allocation0], 3
    %v96 = vld [vmem:[%s95] ss:$8 sm:$0xf]
    %s97 = scalar_lea.vmem [#allocation0], 3
    %v98 = vld [vmem:[%s97] ss:$8 sm:$0xf0]
    %vm99 = vcmask 1047556
    %v100 = vsel %vm99, %v98, %v96
    %101 = vrot.lane.b32.xlu0 %v100, 96
    %v102 = vpop.permute.xlu0 %101
    %vm103 = vcmask 1048320
    %104 = vst.msk [vmem:[%s1] sm:$0xff] %vm103, %v102
    %s105 = scalar_lea.vmem [#allocation0], 67
    %v106 = vld [vmem:[%s105] ss:$8 sm:$0xf]
    %s107 = scalar_lea.vmem [#allocation0], 67
    %v108 = vld [vmem:[%s107] ss:$8 sm:$0xf0]
    %vm109 = vcmask 1047556
    %v110 = vsel %vm109, %v108, %v106
    %111 = vrot.lane.b32.xlu0 %v110, 96
    %v112 = vpop.permute.xlu0 %111
    %vm113 = vcmask 1048320
    %s114 = scalar_lea.vmem %s1, 8
    %115 = vst.msk [vmem:[%s114] sm:$0xff] %vm113, %v112
    %s116 = scalar_lea.vmem [#allocation0], 2
    %v117 = vld [vmem:[%s116] ss:$8 sm:$0xf]
    %s118 = scalar_lea.vmem [#allocation0], 2
    %v119 = vld [vmem:[%s118] ss:$8 sm:$0xf0]
    %vm120 = vcmask 1047556
    %v121 = vsel %vm120, %v119, %v117
    %122 = vrot.lane.b32.xlu0 %v121, 64
    %v123 = vpop.permute.xlu0 %122
    %vm124 = vcmask 785920
    %125 = vst.msk [vmem:[%s1] sm:$0xff] %vm124, %v123
    %s126 = scalar_lea.vmem [#allocation0], 66
    %v127 = vld [vmem:[%s126] ss:$8 sm:$0xf]
    %s128 = scalar_lea.vmem [#allocation0], 66
    %v129 = vld [vmem:[%s128] ss:$8 sm:$0xf0]
    %vm130 = vcmask 1047556
    %v131 = vsel %vm130, %v129, %v127
    %132 = vrot.lane.b32.xlu0 %v131, 64
    %v133 = vpop.permute.xlu0 %132
    %vm134 = vcmask 785920
    %s135 = scalar_lea.vmem %s1, 8
    %136 = vst.msk [vmem:[%s135] sm:$0xff] %vm134, %v133
    %s137 = scalar_lea.vmem [#allocation0], 1
    %v138 = vld [vmem:[%s137] ss:$8 sm:$0xf]
    %s139 = scalar_lea.vmem [#allocation0], 1
    %v140 = vld [vmem:[%s139] ss:$8 sm:$0xf0]
    %vm141 = vcmask 1047556
    %v142 = vsel %vm141, %v140, %v138
    %143 = vrot.lane.b32.xlu0 %v142, 32
    %v144 = vpop.permute.xlu0 %143
    %vm145 = vcmask 523520
    %146 = vst.msk [vmem:[%s1] sm:$0xff] %vm145, %v144
    %s147 = scalar_lea.vmem [#allocation0], 65
    %v148 = vld [vmem:[%s147] ss:$8 sm:$0xf]
    %s149 = scalar_lea.vmem [#allocation0], 65
    %v150 = vld [vmem:[%s149] ss:$8 sm:$0xf0]
    %vm151 = vcmask 1047556
    %v152 = vsel %vm151, %v150, %v148
    %153 = vrot.lane.b32.xlu0 %v152, 32
    %v154 = vpop.permute.xlu0 %153
    %vm155 = vcmask 523520
    %s156 = scalar_lea.vmem %s1, 8
    %157 = vst.msk [vmem:[%s156] sm:$0xff] %vm155, %v154

// kernel: dgcnn_forward.1
$region0: #{dgcnn_forward.1}
  #allocation0 [shape = 'u32[]', space=smem, size = 0x4, offset = 0x4, fixed_abs, tag = 'smem constant byte address 0x4 - core index']
  #allocation1 [shape = 'u32[144,128]{1,0:T(1,128)}', space=vmem, size = 0x12000, scoped, tag = 'internal scratch']
  #allocation2 [shape = 'f32[4,512]{1,0:T(4,128)}', space=vmem, size = 0x2000, scoped, tag = 'scratch operand']
  %s0 = inlined_call_operand.vmem [shape: f32[16,32], index: 0, kind: input, shape index: {}]
  %s1 = inlined_call_operand.vmem [shape: f32[32,384], index: 1, kind: input, shape index: {}]
  %s2 = inlined_call_operand.vmem [shape: f32[16,48], index: 2, kind: input, shape index: {}]
  %s3 = inlined_call_operand.vmem [shape: f32[16,128], index: 3, kind: input, shape index: {}]
  %s4 = inlined_call_operand.vmem [shape: f32[512,64], index: 4, kind: input, shape index: {}]
  %s5 = inlined_call_operand.vmem [shape: f32[1,64], index: 5, kind: input, shape index: {}]
  %s6 = inlined_call_operand.vmem [shape: f32[64,128], index: 6, kind: input, shape index: {}]
  %s7 = inlined_call_operand.vmem [shape: f32[1,128], index: 7, kind: input, shape index: {}]
  %s8 = inlined_call_operand.hbm [shape: f32[4,128], index: 8, kind: output, shape index: {}]
  %s9 = sld [smem:[#allocation0]]
  $region42: #{dgcnn_forward.1} parent=0
    _
  %s11 = ssub.s32 1, %s9
  %s12 = scalar_select 0, %s11, %s9
  $region1: #{dgcnn_forward.1} parent=0
    #allocation3 [shape = 'u8[2048]{0}', space=vmem, size = 0x800, scoped, tag = 'output window, operand 0, single buffered']
    #allocation4 [shape = 's32[1]{0}', space=sflag, size = 0x4, scoped, tag = 'scoped memory for dgcnn_forward.1']
    %13 = vsyncpa [#allocation4], 0
    // Predicated region
    $region2: #{dgcnn_forward.1} parent=1 // pred_check
      _
    $region3: #{dgcnn_forward.1} parent=1 // pred_check_branch
      %15 = sbr.rel (0) target = $region5
    $region4: #{dgcnn_forward.1} parent=1 // pred_region
      _
    $region5: #{dgcnn_forward.1} parent=1 // pred_fallthru
      _
    // Predicated region
    $region6: #{dgcnn_forward.1} parent=1 // pred_check
      _
    $region7: #{dgcnn_forward.1} parent=1 // pred_check_branch
      %17 = sbr.rel (0) target = $region9
    $region8: #{dgcnn_forward.1} parent=1 // pred_region
      _
    $region9: #{dgcnn_forward.1} parent=1 // pred_fallthru
      _
    // Predicated region
    $region10: #{dgcnn_forward.1} parent=1 // pred_check
      _
    $region11: #{dgcnn_forward.1} parent=1 // pred_check_branch
      %19 = sbr.rel (0) target = $region13
    $region12: #{dgcnn_forward.1} parent=1 // pred_region
      _
    $region13: #{dgcnn_forward.1} parent=1 // pred_fallthru
      _
    // Predicated region
    $region14: #{dgcnn_forward.1} parent=1 // pred_check
      _
    $region15: #{dgcnn_forward.1} parent=1 // pred_check_branch
      %21 = sbr.rel (0) target = $region17
    $region16: #{dgcnn_forward.1} parent=1 // pred_region
      _
    $region17: #{dgcnn_forward.1} parent=1 // pred_fallthru
      _
    // Predicated region
    $region18: #{dgcnn_forward.1} parent=1 // pred_check
      _
    $region19: #{dgcnn_forward.1} parent=1 // pred_check_branch
      %23 = sbr.rel (0) target = $region21
    $region20: #{dgcnn_forward.1} parent=1 // pred_region
      _
    $region21: #{dgcnn_forward.1} parent=1 // pred_fallthru
      _
    // Predicated region
    $region22: #{dgcnn_forward.1} parent=1 // pred_check
      _
    $region23: #{dgcnn_forward.1} parent=1 // pred_check_branch
      %25 = sbr.rel (0) target = $region25
    $region24: #{dgcnn_forward.1} parent=1 // pred_region
      _
    $region25: #{dgcnn_forward.1} parent=1 // pred_fallthru
      _
    // Predicated region
    $region26: #{dgcnn_forward.1} parent=1 // pred_check
      _
    $region27: #{dgcnn_forward.1} parent=1 // pred_check_branch
      %27 = sbr.rel (0) target = $region29
    $region28: #{dgcnn_forward.1} parent=1 // pred_region
      _
    $region29: #{dgcnn_forward.1} parent=1 // pred_fallthru
      _
    // Predicated region
    $region30: #{dgcnn_forward.1} parent=1 // pred_check
      _
    $region31: #{dgcnn_forward.1} parent=1 // pred_check_branch
      %29 = sbr.rel (0) target = $region33
    $region32: #{dgcnn_forward.1} parent=1 // pred_region
      _
    $region33: #{dgcnn_forward.1} parent=1 // pred_fallthru
      _
    %v30 = vld [vmem:[%s0] sm:$0xff]
    %v31 = vld [vmem:[%s0 + $0x8] sm:$0xff]
    %v32 = vld [vmem:[%s1] sm:$0xff]
    %v33 = vld [vmem:[%s1 + $0x8] sm:$0xff]
    %v34 = vld [vmem:[%s1 + $0x10] sm:$0xff]
    %v35 = vld [vmem:[%s1 + $0x18] sm:$0xff]
    %v36 = vld [vmem:[%s1 + $0x20] sm:$0xff]
    %v37 = vld [vmem:[%s1 + $0x28] sm:$0xff]
    %v38 = vld [vmem:[%s1 + $0x30] sm:$0xff]
    %v39 = vld [vmem:[%s1 + $0x38] sm:$0xff]
    %v40 = vld [vmem:[%s1 + $0x40] sm:$0xff]
    %v41 = vld [vmem:[%s1 + $0x48] sm:$0xff]
    %v42 = vld [vmem:[%s1 + $0x50] sm:$0xff]
    %v43 = vld [vmem:[%s1 + $0x58] sm:$0xff]
    %vm44 = vcmask 261120
    %v46 = vsel %vm44, %v30, 0
    %v49 = vsel %vm44, %v31, 0
    %51 = vmatprep.subr.mxu0 %v33
    %52 = vmatpush1.msra.mxu0 %v32
    %53 = vmatprep.subr.mxu0 %v36
    %54 = vmatpush1.msra.mxu0 %v35
    %55 = vmatprep.subr.mxu0 %v39
    %56 = vmatpush1.msra.mxu0 %v38
    %57 = vmatprep.subr.mxu0 %v42
    %58 = vmatpush1.msra.mxu0 %v41
    %59 = vmatprep.subr.mxu0 0.0
    %60 = vmatpush1.msra.mxu0 0.0
    %61 = vmatprep.subr.mxu0 0.0
    %62 = vmatpush1.msra.mxu0 0.0
    %63 = vmatprep.subr.mxu0 0.0
    %64 = vmatpush1.msra.mxu0 0.0
    %65 = vmatprep.subr.mxu0 0.0
    %66 = vmatpush1.msra.mxu0 0.0
    %67 = vmatprep.subr.mxu0 0.0
    %68 = vmatpush1.msra.mxu0 0.0
    %69 = vmatprep.subr.mxu0 0.0
    %70 = vmatpush1.msra.mxu0 0.0
    %71 = vmatprep.subr.mxu0 0.0
    %72 = vmatpush1.msra.mxu0 0.0
    %73 = vmatprep.subr.mxu0 0.0
    %74 = vmatpush1.msra.mxu0 0.0
    %75 = vmatprep.subr.mxu0 0.0
    %76 = vmatpush1.msra.mxu0 0.0
    %77 = vmatprep.subr.mxu0 0.0
    %78 = vmatpush1.msra.mxu0 0.0
    %79 = vmatprep.subr.mxu0 0.0
    %80 = vmatpush1.msra.mxu0 0.0
    %81 = vmatprep.subr.mxu0 0.0
    %82 = vmatpush1.msra.mxu0 0.0
    %83 = vmatprep.subr.mxu0 0.0
    %84 = vmatpush1.msra.mxu0 0.0
    %85 = vmatprep.subr.mxu0 0.0
    %86 = vmatpush1.msra.mxu0 0.0
    %87 = vmatprep.subr.mxu0 0.0
    %88 = vmatpush1.msra.mxu0 0.0
    %89 = vmatprep.subr.mxu0 0.0
    %90 = vmatpush1.msra.mxu0 0.0
    %91 = vmatprep.subr.mxu0 0.0
    %92 = vmatpush1.msra.mxu0 0.0
    %93 = vmatprep.subr.mxu0 0.0
    %94 = vmatpush1.msra.mxu0 0.0
    %95 = vmatprep.subr.mxu0 0.0
    %96 = vmatpush1.msra.mxu0 0.0
    %97 = vmatprep.subr.mxu0 0.0
    %98 = vmatpush1.msra.mxu0 0.0
    %99 = vmatprep.subr.mxu0 0.0
    %100 = vmatpush1.msra.mxu0 0.0
    %101 = vmatprep.subr.mxu0 0.0
    %102 = vmatpush1.msra.mxu0 0.0
    %103 = vmatprep.subr.mxu0 0.0
    %104 = vmatpush1.msra.mxu0 0.0
    %105 = vmatprep.subr.mxu0 0.0
    %106 = vmatpush1.msra.mxu0 0.0
    %107 = vmatprep.subr.mxu0 0.0
    %108 = vmatpush1.msra.mxu0 0.0
    %109 = vmatprep.subr.mxu0 0.0
    %110 = vmatpush1.msra.mxu0 0.0
    %111 = vmatprep.subr.mxu0 0.0
    %112 = vmatpush1.msra.mxu0 0.0
    %113 = vmatprep.subr.mxu0 0.0
    %114 = vmatpush1.msra.mxu0 0.0
    %115 = vmatprep.mubr.f32.mxu0 0.0
    %116 = vmatmul.mubr.f32.gmra.mrb[0].mxu0 %v46
    %v117 = vpop.f32.mrb[0].mxu0
    %v118 = vadd.f32 0.0, %v117
    %v119 = vpop.f32.mrb[0].mxu0
    %v120 = vadd.f32 0.0, %v119
    %121 = vmatprep.mubr.f32.mxu0 0.0
    %122 = vmatmul.mubr.f32.gmra.mrb[0].mxu0 %v49
    %v123 = vpop.f32.mrb[0].mxu0
    %v124 = vadd.f32 0.0, %v123
    %v125 = vpop.f32.mrb[0].mxu0
    %v126 = vadd.f32 0.0, %v125
    %127 = vdwg.mxu0
    %128 = vmatprep.subr.mxu0 0.0
    %129 = vmatpush1.msra.mxu0 %v34
    %130 = vmatprep.subr.mxu0 0.0
    %131 = vmatpush1.msra.mxu0 %v37
    %132 = vmatprep.subr.mxu0 0.0
    %133 = vmatpush1.msra.mxu0 %v40
    %134 = vmatprep.subr.mxu0 0.0
    %135 = vmatpush1.msra.mxu0 %v43
    %136 = vmatprep.subr.mxu0 0.0
    %137 = vmatpush1.msra.mxu0 0.0
    %138 = vmatprep.subr.mxu0 0.0
    %139 = vmatpush1.msra.mxu0 0.0
    %140 = vmatprep.subr.mxu0 0.0
    %141 = vmatpush1.msra.mxu0 0.0
    %142 = vmatprep.subr.mxu0 0.0
    %143 = vmatpush1.msra.mxu0 0.0
    %144 = vmatprep.subr.mxu0 0.0
    %145 = vmatpush1.msra.mxu0 0.0
    %146 = vmatprep.subr.mxu0 0.0
    %147 = vmatpush1.msra.mxu0 0.0
    %148 = vmatprep.subr.mxu0 0.0
    %149 = vmatpush1.msra.mxu0 0.0
    %150 = vmatprep.subr.mxu0 0.0
    %151 = vmatpush1.msra.mxu0 0.0
    %152 = vmatprep.subr.mxu0 0.0
    %153 = vmatpush1.msra.mxu0 0.0
    %154 = vmatprep.subr.mxu0 0.0
    %155 = vmatpush1.msra.mxu0 0.0
    %156 = vmatprep.subr.mxu0 0.0
    %157 = vmatpush1.msra.mxu0 0.0
    %158 = vmatprep.subr.mxu0 0.0
    %159 = vmatpush1.msra.mxu0 0.0
    %160 = vmatprep.subr.mxu0 0.0
    %161 = vmatpush1.msra.mxu0 0.0
    %162 = vmatprep.subr.mxu0 0.0
    %163 = vmatpush1.msra.mxu0 0.0
    %164 = vmatprep.subr.mxu0 0.0
    %165 = vmatpush1.msra.mxu0 0.0
    %166 = vmatprep.subr.mxu0 0.0
    %167 = vmatpush1.msra.mxu0 0.0
    %168 = vmatprep.subr.mxu0 0.0
    %169 = vmatpush1.msra.mxu0 0.0
    %170 = vmatprep.subr.mxu0 0.0
    %171 = vmatpush1.msra.mxu0 0.0
    %172 = vmatprep.subr.mxu0 0.0
    %173 = vmatpush1.msra.mxu0 0.0
    %174 = vmatprep.subr.mxu0 0.0
    %175 = vmatpush1.msra.mxu0 0.0
    %176 = vmatprep.subr.mxu0 0.0
    %177 = vmatpush1.msra.mxu0 0.0
    %178 = vmatprep.subr.mxu0 0.0
    %179 = vmatpush1.msra.mxu0 0.0
    %180 = vmatprep.subr.mxu0 0.0
    %181 = vmatpush1.msra.mxu0 0.0
    %182 = vmatprep.subr.mxu0 0.0
    %183 = vmatpush1.msra.mxu0 0.0
    %184 = vmatprep.subr.mxu0 0.0
    %185 = vmatpush1.msra.mxu0 0.0
    %186 = vmatprep.subr.mxu0 0.0
    %187 = vmatpush1.msra.mxu0 0.0
    %188 = vmatprep.subr.mxu0 0.0
    %189 = vmatpush1.msra.mxu0 0.0
    %190 = vmatprep.subr.mxu0 0.0
    %191 = vmatpush1.msra.mxu0 0.0
    %192 = vmatprep.mubr.f32.mxu0 0.0
    %193 = vmatmul.mubr.f32.gmra.mrb[0].mxu0 %v46
    %v194 = vpop.f32.mrb[0].mxu0
    %v195 = vadd.f32 0.0, %v194
    %v196 = vpop.f32.mrb[0].mxu0
    %197 = vmatprep.mubr.f32.mxu0 0.0
    %198 = vmatmul.mubr.f32.gmra.mrb[0].mxu0 %v49
    %v199 = vpop.f32.mrb[0].mxu0
    %v200 = vadd.f32 0.0, %v199
    %v201 = vpop.f32.mrb[0].mxu0
    %202 = vdwg.mxu0
    %v203 = vld [vmem:[%s2] sm:$0xff]
    %v204 = vld [vmem:[%s2 + $0x8] sm:$0xff]
    %v205 = vld [vmem:[%s3] sm:$0xff]
    %v206 = vld [vmem:[%s3 + $0x8] sm:$0xff]
    %vm207 = vcmask 392192
    %v209 = vsel %vm207, %v203, 0
    %v212 = vsel %vm207, %v204, 0
    %214 = vmatprep.subr.mxu0 0.0
    %215 = vmatpush1.msra.mxu0 %v118
    %216 = vmatprep.subr.mxu0 0.0
    %217 = vmatpush1.msra.mxu0 %v124
    %218 = vmatprep.subr.mxu0 0.0
    %219 = vmatpush1.msra.mxu0 %v120
    %220 = vmatprep.subr.mxu0 0.0
    %221 = vmatpush1.msra.mxu0 %v126
    %222 = vmatprep.subr.mxu0 0.0
    %223 = vmatpush1.msra.mxu0 %v195
    %224 = vmatprep.subr.mxu0 0.0
    %225 = vmatpush1.msra.mxu0 %v200
    %226 = vmatprep.subr.mxu0 0.0
    %227 = vmatpush1.msra.mxu0 0.0
    %228 = vmatprep.subr.mxu0 0.0
    %229 = vmatpush1.msra.mxu0 0.0
    %230 = vmatprep.subr.mxu0 0.0
    %231 = vmatpush1.msra.mxu0 0.0
    %232 = vmatprep.subr.mxu0 0.0
    %233 = vmatpush1.msra.mxu0 0.0
    %234 = vmatprep.subr.mxu0 0.0
    %235 = vmatpush1.msra.mxu0 0.0
    %236 = vmatprep.subr.mxu0 0.0
    %237 = vmatpush1.msra.mxu0 0.0
    %238 = vmatprep.subr.mxu0 0.0
    %239 = vmatpush1.msra.mxu0 0.0
    %240 = vmatprep.subr.mxu0 0.0
    %241 = vmatpush1.msra.mxu0 0.0
    %242 = vmatprep.subr.mxu0 0.0
    %243 = vmatpush1.msra.mxu0 0.0
    %244 = vmatprep.subr.mxu0 0.0
    %245 = vmatpush1.msra.mxu0 0.0
    %246 = vmatprep.subr.mxu0 0.0
    %247 = vmatpush1.msra.mxu0 0.0
    %248 = vmatprep.subr.mxu0 0.0
    %249 = vmatpush1.msra.mxu0 0.0
    %250 = vmatprep.subr.mxu0 0.0
    %251 = vmatpush1.msra.mxu0 0.0
    %252 = vmatprep.subr.mxu0 0.0
    %253 = vmatpush1.msra.mxu0 0.0
    %254 = vmatprep.subr.mxu0 0.0
    %255 = vmatpush1.msra.mxu0 0.0
    %256 = vmatprep.subr.mxu0 0.0
    %257 = vmatpush1.msra.mxu0 0.0
    %258 = vmatprep.subr.mxu0 0.0
    %259 = vmatpush1.msra.mxu0 0.0
    %260 = vmatprep.subr.mxu0 0.0
    %261 = vmatpush1.msra.mxu0 0.0
    %262 = vmatprep.subr.mxu0 0.0
    %263 = vmatpush1.msra.mxu0 0.0
    %264 = vmatprep.subr.mxu0 0.0
    %265 = vmatpush1.msra.mxu0 0.0
    %266 = vmatprep.subr.mxu0 0.0
    %267 = vmatpush1.msra.mxu0 0.0
    %268 = vmatprep.subr.mxu0 0.0
    %269 = vmatpush1.msra.mxu0 0.0
    %270 = vmatprep.subr.mxu0 0.0
    %271 = vmatpush1.msra.mxu0 0.0
    %272 = vmatprep.subr.mxu0 0.0
    %273 = vmatpush1.msra.mxu0 0.0
    %274 = vmatprep.subr.mxu0 0.0
    %275 = vmatpush1.msra.mxu0 0.0
    %276 = vmatprep.subr.mxu0 0.0
    %277 = vmatpush1.msra.mxu0 0.0
    %278 = vmatprep.mubr.f32.mxu0 0.0
    %279 = vmatmul.mubr.f32.gmra.mrb[0].mxu0 %v209
    %v280 = vpop.f32.mrb[0].mxu0
    %v281 = vadd.f32 %v205, %v280
    %v282 = vpop.f32.mrb[0].mxu0
    %283 = vmatprep.mubr.f32.mxu0 0.0
    %284 = vmatmul.mubr.f32.gmra.mrb[0].mxu0 %v212
    %v285 = vpop.f32.mrb[0].mxu0
    %v286 = vadd.f32 %v206, %v285
    %v287 = vpop.f32.mrb[0].mxu0
    %288 = vdwg.mxu0
    %v289 = vmax.f32 %v281, 0.0
    %v290 = vmax.f32 %v286, 0.0
    %vm291 = vcmask 253952
    %292 = vst.msk [vmem:[#allocation2] sm:$0x1] %vm291, %v289
    %v294 = vrot.slane %v289, 5
    %v295 = vrot.slane %v294, 4
    %296 = vrot.lane.b32.xlu0 %v295, 32
    %v297 = vpop.permute.xlu0 %296
    %vm299 = vcmask 516352
    %300 = vst.msk [vmem:[#allocation2] sm:$0x1] %vm299, %v297
    %v301 = vrot.slane %v289, 6
    %v302 = vrot.slane %v301, 4
    %303 = vrot.lane.b32.xlu0 %v302, 64
    %v304 = vpop.permute.xlu0 %303
    %vm306 = vcmask 778752
    %307 = vst.msk [vmem:[#allocation2] sm:$0x1] %vm306, %v304
    %v308 = vrot.slane %v289, 7
    %v309 = vrot.slane %v308, 4
    %310 = vrot.lane.b32.xlu0 %v309, 96
    %v311 = vpop.permute.xlu0 %310
    %vm313 = vcmask 1041152
    %314 = vst.msk [vmem:[#allocation2] sm:$0x1] %vm313, %v311
    %v315 = vcombine.high %v289, %v289
    %317 = vst.msk [vmem:[#allocation2 + $0x4] sm:$0x1] %vm291, %v315
    %v318 = vrot.slane %v315, 5
    %v319 = vrot.slane %v318, 4
    %320 = vrot.lane.b32.xlu0 %v319, 32
    %v321 = vpop.permute.xlu0 %320
    %323 = vst.msk [vmem:[#allocation2 + $0x4] sm:$0x1] %vm299, %v321
    %v324 = vrot.slane %v315, 6
    %v325 = vrot.slane %v324, 4
    %326 = vrot.lane.b32.xlu0 %v325, 64
    %v327 = vpop.permute.xlu0 %326
    %329 = vst.msk [vmem:[#allocation2 + $0x4] sm:$0x1] %vm306, %v327
    %v330 = vrot.slane %v315, 7
    %v331 = vrot.slane %v330, 4
    %332 = vrot.lane.b32.xlu0 %v331, 96
    %v333 = vpop.permute.xlu0 %332
    %335 = vst.msk [vmem:[#allocation2 + $0x4] sm:$0x1] %vm313, %v333
    %336 = vst.msk [vmem:[#allocation2 + $0x8] sm:$0x1] %vm291, %v290
    %v338 = vrot.slane %v290, 5
    %v339 = vrot.slane %v338, 4
    %340 = vrot.lane.b32.xlu0 %v339, 32
    %v341 = vpop.permute.xlu0 %340
    %343 = vst.msk [vmem:[#allocation2 + $0x8] sm:$0x1] %vm299, %v341
    %v344 = vrot.slane %v290, 6
    %v345 = vrot.slane %v344, 4
    %346 = vrot.lane.b32.xlu0 %v345, 64
    %v347 = vpop.permute.xlu0 %346
    %349 = vst.msk [vmem:[#allocation2 + $0x8] sm:$0x1] %vm306, %v347
    %v350 = vrot.slane %v290, 7
    %v351 = vrot.slane %v350, 4
    %352 = vrot.lane.b32.xlu0 %v351, 96
    %v353 = vpop.permute.xlu0 %352
    %355 = vst.msk [vmem:[#allocation2 + $0x8] sm:$0x1] %vm313, %v353
    %v356 = vcombine.high %v290, %v290
    %358 = vst.msk [vmem:[#allocation2 + $0xc] sm:$0x1] %vm291, %v356
    %v359 = vrot.slane %v356, 5
    %v360 = vrot.slane %v359, 4
    %361 = vrot.lane.b32.xlu0 %v360, 32
    %v362 = vpop.permute.xlu0 %361
    %364 = vst.msk [vmem:[#allocation2 + $0xc] sm:$0x1] %vm299, %v362
    %v365 = vrot.slane %v356, 6
    %v366 = vrot.slane %v365, 4
    %367 = vrot.lane.b32.xlu0 %v366, 64
    %v368 = vpop.permute.xlu0 %367
    %370 = vst.msk [vmem:[#allocation2 + $0xc] sm:$0x1] %vm306, %v368
    %v371 = vrot.slane %v356, 7
    %v372 = vrot.slane %v371, 4
    %373 = vrot.lane.b32.xlu0 %v372, 96
    %v374 = vpop.permute.xlu0 %373
    %376 = vst.msk [vmem:[#allocation2 + $0xc] sm:$0x1] %vm313, %v374
    %377 = vrot.lane.b32.xlu0 %v289, 96
    %v378 = vpop.permute.xlu0 %377
    %380 = vst.msk [vmem:[#allocation2 + $0x1] sm:$0x1] %vm291, %v378
    %382 = vst.msk [vmem:[#allocation2 + $0x1] sm:$0x1] %vm299, %v295
    %383 = vrot.lane.b32.xlu0 %v302, 32
    %v384 = vpop.permute.xlu0 %383
    %386 = vst.msk [vmem:[#allocation2 + $0x1] sm:$0x1] %vm306, %v384
    %387 = vrot.lane.b32.xlu0 %v309, 64
    %v388 = vpop.permute.xlu0 %387
    %390 = vst.msk [vmem:[#allocation2 + $0x1] sm:$0x1] %vm313, %v388
    %391 = vrot.lane.b32.xlu0 %v315, 96
    %v392 = vpop.permute.xlu0 %391
    %394 = vst.msk [vmem:[#allocation2 + $0x5] sm:$0x1] %vm291, %v392
    %396 = vst.msk [vmem:[#allocation2 + $0x5] sm:$0x1] %vm299, %v319
    %397 = vrot.lane.b32.xlu0 %v325, 32
    %v398 = vpop.permute.xlu0 %397
    %400 = vst.msk [vmem:[#allocation2 + $0x5] sm:$0x1] %vm306, %v398
    %401 = vrot.lane.b32.xlu0 %v331, 64
    %v402 = vpop.permute.xlu0 %401
    %404 = vst.msk [vmem:[#allocation2 + $0x5] sm:$0x1] %vm313, %v402
    %405 = vrot.lane.b32.xlu0 %v290, 96
    %v406 = vpop.permute.xlu0 %405
    %408 = vst.msk [vmem:[#allocation2 + $0x9] sm:$0x1] %vm291, %v406
    %410 = vst.msk [vmem:[#allocation2 + $0x9] sm:$0x1] %vm299, %v339
    %411 = vrot.lane.b32.xlu0 %v345, 32
    %v412 = vpop.permute.xlu0 %411
    %414 = vst.msk [vmem:[#allocation2 + $0x9] sm:$0x1] %vm306, %v412
    %415 = vrot.lane.b32.xlu0 %v351, 64
    %v416 = vpop.permute.xlu0 %415
    %418 = vst.msk [vmem:[#allocation2 + $0x9] sm:$0x1] %vm313, %v416
    %419 = vrot.lane.b32.xlu0 %v356, 96
    %v420 = vpop.permute.xlu0 %419
    %422 = vst.msk [vmem:[#allocation2 + $0xd] sm:$0x1] %vm291, %v420
    %424 = vst.msk [vmem:[#allocation2 + $0xd] sm:$0x1] %vm299, %v360
    %425 = vrot.lane.b32.xlu0 %v366, 32
    %v426 = vpop.permute.xlu0 %425
    %428 = vst.msk [vmem:[#allocation2 + $0xd] sm:$0x1] %vm306, %v426
    %429 = vrot.lane.b32.xlu0 %v372, 64
    %v430 = vpop.permute.xlu0 %429
    %432 = vst.msk [vmem:[#allocation2 + $0xd] sm:$0x1] %vm313, %v430
    %433 = vrot.lane.b32.xlu0 %v289, 64
    %v434 = vpop.permute.xlu0 %433
    %436 = vst.msk [vmem:[#allocation2 + $0x2] sm:$0x1] %vm291, %v434
    %437 = vrot.lane.b32.xlu0 %v295, 96
    %v438 = vpop.permute.xlu0 %437
    %440 = vst.msk [vmem:[#allocation2 + $0x2] sm:$0x1] %vm299, %v438
    %442 = vst.msk [vmem:[#allocation2 + $0x2] sm:$0x1] %vm306, %v302
    %443 = vrot.lane.b32.xlu0 %v309, 32
    %v444 = vpop.permute.xlu0 %443
    %446 = vst.msk [vmem:[#allocation2 + $0x2] sm:$0x1] %vm313, %v444
    %447 = vrot.lane.b32.xlu0 %v315, 64
    %v448 = vpop.permute.xlu0 %447
    %450 = vst.msk [vmem:[#allocation2 + $0x6] sm:$0x1] %vm291, %v448
    %451 = vrot.lane.b32.xlu0 %v319, 96
    %v452 = vpop.permute.xlu0 %451
    %454 = vst.msk [vmem:[#allocation2 + $0x6] sm:$0x1] %vm299, %v452
    %456 = vst.msk [vmem:[#allocation2 + $0x6] sm:$0x1] %vm306, %v325
    %457 = vrot.lane.b32.xlu0 %v331, 32
    %v458 = vpop.permute.xlu0 %457
    %460 = vst.msk [vmem:[#allocation2 + $0x6] sm:$0x1] %vm313, %v458
    %461 = vrot.lane.b32.xlu0 %v290, 64
    %v462 = vpop.permute.xlu0 %461
    %464 = vst.msk [vmem:[#allocation2 + $0xa] sm:$0x1] %vm291, %v462
    %465 = vrot.lane.b32.xlu0 %v339, 96
    %v466 = vpop.permute.xlu0 %465
    %468 = vst.msk [vmem:[#allocation2 + $0xa] sm:$0x1] %vm299, %v466
    %470 = vst.msk [vmem:[#allocation2 + $0xa] sm:$0x1] %vm306, %v345
    %471 = vrot.lane.b32.xlu0 %v351, 32
    %v472 = vpop.permute.xlu0 %471
    %474 = vst.msk [vmem:[#allocation2 + $0xa] sm:$0x1] %vm313, %v472
    %475 = vrot.lane.b32.xlu0 %v356, 64
    %v476 = vpop.permute.xlu0 %475
    %478 = vst.msk [vmem:[#allocation2 + $0xe] sm:$0x1] %vm291, %v476
    %479 = vrot.lane.b32.xlu0 %v360, 96
    %v480 = vpop.permute.xlu0 %479
    %482 = vst.msk [vmem:[#allocation2 + $0xe] sm:$0x1] %vm299, %v480
    %484 = vst.msk [vmem:[#allocation2 + $0xe] sm:$0x1] %vm306, %v366
    %485 = vrot.lane.b32.xlu0 %v372, 32
    %v486 = vpop.permute.xlu0 %485
    %488 = vst.msk [vmem:[#allocation2 + $0xe] sm:$0x1] %vm313, %v486
    %489 = vrot.lane.b32.xlu0 %v289, 32
    %v490 = vpop.permute.xlu0 %489
    %492 = vst.msk [vmem:[#allocation2 + $0x3] sm:$0x1] %vm291, %v490
    %493 = vrot.lane.b32.xlu0 %v295, 64
    %v494 = vpop.permute.xlu0 %493
    %496 = vst.msk [vmem:[#allocation2 + $0x3] sm:$0x1] %vm299, %v494
    %497 = vrot.lane.b32.xlu0 %v302, 96
    %v498 = vpop.permute.xlu0 %497
    %500 = vst.msk [vmem:[#allocation2 + $0x3] sm:$0x1] %vm306, %v498
    %502 = vst.msk [vmem:[#allocation2 + $0x3] sm:$0x1] %vm313, %v309
    %503 = vrot.lane.b32.xlu0 %v315, 32
    %v504 = vpop.permute.xlu0 %503
    %506 = vst.msk [vmem:[#allocation2 + $0x7] sm:$0x1] %vm291, %v504
    %507 = vrot.lane.b32.xlu0 %v319, 64
    %v508 = vpop.permute.xlu0 %507
    %510 = vst.msk [vmem:[#allocation2 + $0x7] sm:$0x1] %vm299, %v508
    %511 = vrot.lane.b32.xlu0 %v325, 96
    %v512 = vpop.permute.xlu0 %511
    %514 = vst.msk [vmem:[#allocation2 + $0x7] sm:$0x1] %vm306, %v512
    %516 = vst.msk [vmem:[#allocation2 + $0x7] sm:$0x1] %vm313, %v331
    %517 = vrot.lane.b32.xlu0 %v290, 32
    %v518 = vpop.permute.xlu0 %517
    %520 = vst.msk [vmem:[#allocation2 + $0xb] sm:$0x1] %vm291, %v518
    %521 = vrot.lane.b32.xlu0 %v339, 64
    %v522 = vpop.permute.xlu0 %521
    %524 = vst.msk [vmem:[#allocation2 + $0xb] sm:$0x1] %vm299, %v522
    %525 = vrot.lane.b32.xlu0 %v345, 96
    %v526 = vpop.permute.xlu0 %525
    %528 = vst.msk [vmem:[#allocation2 + $0xb] sm:$0x1] %vm306, %v526
    %530 = vst.msk [vmem:[#allocation2 + $0xb] sm:$0x1] %vm313, %v351
    %531 = vrot.lane.b32.xlu0 %v356, 32
    %v532 = vpop.permute.xlu0 %531
    %534 = vst.msk [vmem:[#allocation2 + $0xf] sm:$0x1] %vm291, %v532
    %535 = vrot.lane.b32.xlu0 %v360, 64
    %v536 = vpop.permute.xlu0 %535
    %538 = vst.msk [vmem:[#allocation2 + $0xf] sm:$0x1] %vm299, %v536
    %539 = vrot.lane.b32.xlu0 %v366, 96
    %v540 = vpop.permute.xlu0 %539
    %542 = vst.msk [vmem:[#allocation2 + $0xf] sm:$0x1] %vm306, %v540
    %544 = vst.msk [vmem:[#allocation2 + $0xf] sm:$0x1] %vm313, %v372
    %v545 = vld [vmem:[#allocation2] sm:$0xff]
    %v546 = vld [vmem:[#allocation2 + $0x8] sm:$0xff]
    %v547 = vld [vmem:[%s4] sm:$0xff]
    %v548 = vld [vmem:[%s4 + $0x8] sm:$0xff]
    %v549 = vld [vmem:[%s4 + $0x10] sm:$0xff]
    %v550 = vld [vmem:[%s4 + $0x18] sm:$0xff]
    %v551 = vld [vmem:[%s4 + $0x20] sm:$0xff]
    %v552 = vld [vmem:[%s4 + $0x28] sm:$0xff]
    %v553 = vld [vmem:[%s4 + $0x30] sm:$0xff]
    %v554 = vld [vmem:[%s4 + $0x38] sm:$0xff]
    %v555 = vld [vmem:[%s4 + $0x40] sm:$0xff]
    %v556 = vld [vmem:[%s4 + $0x48] sm:$0xff]
    %v557 = vld [vmem:[%s4 + $0x50] sm:$0xff]
    %v558 = vld [vmem:[%s4 + $0x58] sm:$0xff]
    %v559 = vld [vmem:[%s4 + $0x60] sm:$0xff]
    %v560 = vld [vmem:[%s4 + $0x68] sm:$0xff]
    %v561 = vld [vmem:[%s4 + $0x70] sm:$0xff]
    %v562 = vld [vmem:[%s4 + $0x78] sm:$0xff]
    %v563 = vld [vmem:[%s4 + $0x80] sm:$0xff]
    %v564 = vld [vmem:[%s4 + $0x88] sm:$0xff]
    %v565 = vld [vmem:[%s4 + $0x90] sm:$0xff]
    %v566 = vld [vmem:[%s4 + $0x98] sm:$0xff]
    %v567 = vld [vmem:[%s4 + $0xa0] sm:$0xff]
    %v568 = vld [vmem:[%s4 + $0xa8] sm:$0xff]
    %v569 = vld [vmem:[%s4 + $0xb0] sm:$0xff]
    %v570 = vld [vmem:[%s4 + $0xb8] sm:$0xff]
    %v571 = vld [vmem:[%s4 + $0xc0] sm:$0xff]
    %v572 = vld [vmem:[%s4 + $0xc8] sm:$0xff]
    %v573 = vld [vmem:[%s4 + $0xd0] sm:$0xff]
    %v574 = vld [vmem:[%s4 + $0xd8] sm:$0xff]
    %v575 = vld [vmem:[%s4 + $0xe0] sm:$0xff]
    %v576 = vld [vmem:[%s4 + $0xe8] sm:$0xff]
    %v577 = vld [vmem:[%s4 + $0xf0] sm:$0xff]
    %v578 = vld [vmem:[%s4 + $0xf8] sm:$0xff]
    %v579 = vld [vmem:[%s4 + $0x100] sm:$0xff]
    %v580 = vld [vmem:[%s4 + $0x108] sm:$0xff]
    %v581 = vld [vmem:[%s4 + $0x110] sm:$0xff]
    %v582 = vld [vmem:[%s4 + $0x118] sm:$0xff]
    %v583 = vld [vmem:[%s4 + $0x120] sm:$0xff]
    %v584 = vld [vmem:[%s4 + $0x128] sm:$0xff]
    %v585 = vld [vmem:[%s4 + $0x130] sm:$0xff]
    %v586 = vld [vmem:[%s4 + $0x138] sm:$0xff]
    %v587 = vld [vmem:[%s4 + $0x140] sm:$0xff]
    %v588 = vld [vmem:[%s4 + $0x148] sm:$0xff]
    %v589 = vld [vmem:[%s4 + $0x150] sm:$0xff]
    %v590 = vld [vmem:[%s4 + $0x158] sm:$0xff]
    %v591 = vld [vmem:[%s4 + $0x160] sm:$0xff]
    %v592 = vld [vmem:[%s4 + $0x168] sm:$0xff]
    %v593 = vld [vmem:[%s4 + $0x170] sm:$0xff]
    %v594 = vld [vmem:[%s4 + $0x178] sm:$0xff]
    %v595 = vld [vmem:[%s4 + $0x180] sm:$0xff]
    %v596 = vld [vmem:[%s4 + $0x188] sm:$0xff]
    %v597 = vld [vmem:[%s4 + $0x190] sm:$0xff]
    %v598 = vld [vmem:[%s4 + $0x198] sm:$0xff]
    %v599 = vld [vmem:[%s4 + $0x1a0] sm:$0xff]
    %v600 = vld [vmem:[%s4 + $0x1a8] sm:$0xff]
    %v601 = vld [vmem:[%s4 + $0x1b0] sm:$0xff]
    %v602 = vld [vmem:[%s4 + $0x1b8] sm:$0xff]
    %v603 = vld [vmem:[%s4 + $0x1c0] sm:$0xff]
    %v604 = vld [vmem:[%s4 + $0x1c8] sm:$0xff]
    %v605 = vld [vmem:[%s4 + $0x1d0] sm:$0xff]
    %v606 = vld [vmem:[%s4 + $0x1d8] sm:$0xff]
    %v607 = vld [vmem:[%s4 + $0x1e0] sm:$0xff]
    %v608 = vld [vmem:[%s4 + $0x1e8] sm:$0xff]
    %v609 = vld [vmem:[%s4 + $0x1f0] sm:$0xff]
    %v610 = vld [vmem:[%s4 + $0x1f8] sm:$0xff]
    %v611 = vld [vmem:[%s5] sm:$0x1]
    %v613 = vlaneseq
    %v614 = vshrl.u32 %v613, 7
    %v615 = vsub.s32 0, %v614
    %v616 = vrot.slane %v611, %v615
    %v620 = vcombine.high %v545, %v545
    %v621 = vcombine.high %v546, %v546
    %624 = vmatprep.subr.mxu0 0.0
    %625 = vmatpush1.msra.mxu0 %v547
    %626 = vmatprep.subr.mxu0 0.0
    %627 = vmatpush1.msra.mxu0 %v548
    %628 = vmatprep.subr.mxu0 0.0
    %629 = vmatpush1.msra.mxu0 %v549
    %630 = vmatprep.subr.mxu0 0.0
    %631 = vmatpush1.msra.mxu0 %v550
    %632 = vmatprep.subr.mxu0 0.0
    %633 = vmatpush1.msra.mxu0 %v551
    %634 = vmatprep.subr.mxu0 0.0
    %635 = vmatpush1.msra.mxu0 %v552
    %636 = vmatprep.subr.mxu0 0.0
    %637 = vmatpush1.msra.mxu0 %v553
    %638 = vmatprep.subr.mxu0 0.0
    %639 = vmatpush1.msra.mxu0 %v554
    %640 = vmatprep.subr.mxu0 0.0
    %641 = vmatpush1.msra.mxu0 %v555
    %642 = vmatprep.subr.mxu0 0.0
    %643 = vmatpush1.msra.mxu0 %v556
    %644 = vmatprep.subr.mxu0 0.0
    %645 = vmatpush1.msra.mxu0 %v557
    %646 = vmatprep.subr.mxu0 0.0
    %647 = vmatpush1.msra.mxu0 %v558
    %648 = vmatprep.subr.mxu0 0.0
    %649 = vmatpush1.msra.mxu0 %v559
    %650 = vmatprep.subr.mxu0 0.0
    %651 = vmatpush1.msra.mxu0 %v560
    %652 = vmatprep.subr.mxu0 0.0
    %653 = vmatpush1.msra.mxu0 %v561
    %654 = vmatprep.subr.mxu0 0.0
    %655 = vmatpush1.msra.mxu0 %v562
    %656 = vmatprep.subr.mxu0 0.0
    %657 = vmatpush1.msra.mxu0 %v563
    %658 = vmatprep.subr.mxu0 0.0
    %659 = vmatpush1.msra.mxu0 %v564
    %660 = vmatprep.subr.mxu0 0.0
    %661 = vmatpush1.msra.mxu0 %v565
    %662 = vmatprep.subr.mxu0 0.0
    %663 = vmatpush1.msra.mxu0 %v566
    %664 = vmatprep.subr.mxu0 0.0
    %665 = vmatpush1.msra.mxu0 %v567
    %666 = vmatprep.subr.mxu0 0.0
    %667 = vmatpush1.msra.mxu0 %v568
    %668 = vmatprep.subr.mxu0 0.0
    %669 = vmatpush1.msra.mxu0 %v569
    %670 = vmatprep.subr.mxu0 0.0
    %671 = vmatpush1.msra.mxu0 %v570
    %672 = vmatprep.subr.mxu0 0.0
    %673 = vmatpush1.msra.mxu0 %v571
    %674 = vmatprep.subr.mxu0 0.0
    %675 = vmatpush1.msra.mxu0 %v572
    %676 = vmatprep.subr.mxu0 0.0
    %677 = vmatpush1.msra.mxu0 %v573
    %678 = vmatprep.subr.mxu0 0.0
    %679 = vmatpush1.msra.mxu0 %v574
    %680 = vmatprep.subr.mxu0 0.0
    %681 = vmatpush1.msra.mxu0 %v575
    %682 = vmatprep.subr.mxu0 0.0
    %683 = vmatpush1.msra.mxu0 %v576
    %684 = vmatprep.subr.mxu0 0.0
    %685 = vmatpush1.msra.mxu0 %v577
    %686 = vmatprep.subr.mxu0 0.0
    %687 = vmatpush1.msra.mxu0 %v578
    %688 = vmatprep.mubr.f32.mxu0 %v620
    %689 = vmatmul.mubr.f32.gmra.mrb[0].mxu0 %v545
    %v690 = vpop.f32.mrb[0].mxu0
    %v691 = vadd.f32 %v616, %v690
    %v692 = vpop.f32.mrb[0].mxu0
    %693 = vdwg.mxu0
    %694 = vmatprep.subr.mxu0 0.0
    %695 = vmatpush1.msra.mxu0 %v579
    %696 = vmatprep.subr.mxu0 0.0
    %697 = vmatpush1.msra.mxu0 %v580
    %698 = vmatprep.subr.mxu0 0.0
    %699 = vmatpush1.msra.mxu0 %v581
    %700 = vmatprep.subr.mxu0 0.0
    %701 = vmatpush1.msra.mxu0 %v582
    %702 = vmatprep.subr.mxu0 0.0
    %703 = vmatpush1.msra.mxu0 %v583
    %704 = vmatprep.subr.mxu0 0.0
    %705 = vmatpush1.msra.mxu0 %v584
    %706 = vmatprep.subr.mxu0 0.0
    %707 = vmatpush1.msra.mxu0 %v585
    %708 = vmatprep.subr.mxu0 0.0
    %709 = vmatpush1.msra.mxu0 %v586
    %710 = vmatprep.subr.mxu0 0.0
    %711 = vmatpush1.msra.mxu0 %v587
    %712 = vmatprep.subr.mxu0 0.0
    %713 = vmatpush1.msra.mxu0 %v588
    %714 = vmatprep.subr.mxu0 0.0
    %715 = vmatpush1.msra.mxu0 %v589
    %716 = vmatprep.subr.mxu0 0.0
    %717 = vmatpush1.msra.mxu0 %v590
    %718 = vmatprep.subr.mxu0 0.0
    %719 = vmatpush1.msra.mxu0 %v591
    %720 = vmatprep.subr.mxu0 0.0
    %721 = vmatpush1.msra.mxu0 %v592
    %722 = vmatprep.subr.mxu0 0.0
    %723 = vmatpush1.msra.mxu0 %v593
    %724 = vmatprep.subr.mxu0 0.0
    %725 = vmatpush1.msra.mxu0 %v594
    %726 = vmatprep.subr.mxu0 0.0
    %727 = vmatpush1.msra.mxu0 %v595
    %728 = vmatprep.subr.mxu0 0.0
    %729 = vmatpush1.msra.mxu0 %v596
    %730 = vmatprep.subr.mxu0 0.0
    %731 = vmatpush1.msra.mxu0 %v597
    %732 = vmatprep.subr.mxu0 0.0
    %733 = vmatpush1.msra.mxu0 %v598
    %734 = vmatprep.subr.mxu0 0.0
    %735 = vmatpush1.msra.mxu0 %v599
    %736 = vmatprep.subr.mxu0 0.0
    %737 = vmatpush1.msra.mxu0 %v600
    %738 = vmatprep.subr.mxu0 0.0
    %739 = vmatpush1.msra.mxu0 %v601
    %740 = vmatprep.subr.mxu0 0.0
    %741 = vmatpush1.msra.mxu0 %v602
    %742 = vmatprep.subr.mxu0 0.0
    %743 = vmatpush1.msra.mxu0 %v603
    %744 = vmatprep.subr.mxu0 0.0
    %745 = vmatpush1.msra.mxu0 %v604
    %746 = vmatprep.subr.mxu0 0.0
    %747 = vmatpush1.msra.mxu0 %v605
    %748 = vmatprep.subr.mxu0 0.0
    %749 = vmatpush1.msra.mxu0 %v606
    %750 = vmatprep.subr.mxu0 0.0
    %751 = vmatpush1.msra.mxu0 %v607
    %752 = vmatprep.subr.mxu0 0.0
    %753 = vmatpush1.msra.mxu0 %v608
    %754 = vmatprep.subr.mxu0 0.0
    %755 = vmatpush1.msra.mxu0 %v609
    %756 = vmatprep.subr.mxu0 0.0
    %757 = vmatpush1.msra.mxu0 %v610
    %758 = vmatprep.mubr.f32.mxu0 %v621
    %759 = vmatmul.mubr.f32.gmra.mrb[0].mxu0 %v546
    %v760 = vpop.f32.mrb[0].mxu0
    %v761 = vadd.f32 %v691, %v760
    %v762 = vpop.f32.mrb[0].mxu0
    %763 = vdwg.mxu0
    %v764 = vmax.f32 %v761, 0.0
    %v765 = vld [vmem:[%s6] sm:$0xff]
    %v766 = vld [vmem:[%s6 + $0x8] sm:$0xff]
    %v767 = vld [vmem:[%s6 + $0x10] sm:$0xff]
    %v768 = vld [vmem:[%s6 + $0x18] sm:$0xff]
    %v769 = vld [vmem:[%s6 + $0x20] sm:$0xff]
    %v770 = vld [vmem:[%s6 + $0x28] sm:$0xff]
    %v771 = vld [vmem:[%s6 + $0x30] sm:$0xff]
    %v772 = vld [vmem:[%s6 + $0x38] sm:$0xff]
    %v773 = vld [vmem:[%s7] sm:$0x1]
    %v775 = vlaneseq
    %v776 = vshrl.u32 %v775, 7
    %v777 = vsub.s32 0, %v776
    %v778 = vrot.slane %v773, %v777
    %vm780 = vcmask 523264
    %v782 = vsel %vm780, %v764, 0
    %784 = vmatprep.subr.mxu0 0.0
    %785 = vmatpush1.msra.mxu0 %v765
    %786 = vmatprep.subr.mxu0 0.0
    %787 = vmatpush1.msra.mxu0 %v766
    %788 = vmatprep.subr.mxu0 0.0
    %789 = vmatpush1.msra.mxu0 %v767
    %790 = vmatprep.subr.mxu0 0.0
    %791 = vmatpush1.msra.mxu0 %v768
    %792 = vmatprep.subr.mxu0 0.0
    %793 = vmatpush1.msra.mxu0 %v769
    %794 = vmatprep.subr.mxu0 0.0
    %795 = vmatpush1.msra.mxu0 %v770
    %796 = vmatprep.subr.mxu0 0.0
    %797 = vmatpush1.msra.mxu0 %v771
    %798 = vmatprep.subr.mxu0 0.0
    %799 = vmatpush1.msra.mxu0 %v772
    %800 = vmatprep.subr.mxu0 0.0
    %801 = vmatpush1.msra.mxu0 0.0
    %802 = vmatprep.subr.mxu0 0.0
    %803 = vmatpush1.msra.mxu0 0.0
    %804 = vmatprep.subr.mxu0 0.0
    %805 = vmatpush1.msra.mxu0 0.0
    %806 = vmatprep.subr.mxu0 0.0
    %807 = vmatpush1.msra.mxu0 0.0
    %808 = vmatprep.subr.mxu0 0.0
    %809 = vmatpush1.msra.mxu0 0.0
    %810 = vmatprep.subr.mxu0 0.0
    %811 = vmatpush1.msra.mxu0 0.0
    %812 = vmatprep.subr.mxu0 0.0
    %813 = vmatpush1.msra.mxu0 0.0
    %814 = vmatprep.subr.mxu0 0.0
    %815 = vmatpush1.msra.mxu0 0.0
    %816 = vmatprep.subr.mxu0 0.0
    %817 = vmatpush1.msra.mxu0 0.0
    %818 = vmatprep.subr.mxu0 0.0
    %819 = vmatpush1.msra.mxu0 0.0
    %820 = vmatprep.subr.mxu0 0.0
    %821 = vmatpush1.msra.mxu0 0.0
    %822 = vmatprep.subr.mxu0 0.0
    %823 = vmatpush1.msra.mxu0 0.0
    %824 = vmatprep.subr.mxu0 0.0
    %825 = vmatpush1.msra.mxu0 0.0
    %826 = vmatprep.subr.mxu0 0.0
    %827 = vmatpush1.msra.mxu0 0.0
    %828 = vmatprep.subr.mxu0 0.0
    %829 = vmatpush1.msra.mxu0 0.0
    %830 = vmatprep.subr.mxu0 0.0
    %831 = vmatpush1.msra.mxu0 0.0
    %832 = vmatprep.subr.mxu0 0.0
    %833 = vmatpush1.msra.mxu0 0.0
    %834 = vmatprep.subr.mxu0 0.0
    %835 = vmatpush1.msra.mxu0 0.0
    %836 = vmatprep.subr.mxu0 0.0
    %837 = vmatpush1.msra.mxu0 0.0
    %838 = vmatprep.subr.mxu0 0.0
    %839 = vmatpush1.msra.mxu0 0.0
    %840 = vmatprep.subr.mxu0 0.0
    %841 = vmatpush1.msra.mxu0 0.0
    %842 = vmatprep.subr.mxu0 0.0
    %843 = vmatpush1.msra.mxu0 0.0
    %844 = vmatprep.subr.mxu0 0.0
    %845 = vmatpush1.msra.mxu0 0.0
    %846 = vmatprep.subr.mxu0 0.0
    %847 = vmatpush1.msra.mxu0 0.0
    %848 = vmatprep.mubr.f32.mxu0 0.0
    %849 = vmatmul.mubr.f32.gmra.mrb[0].mxu0 %v782
    %v850 = vpop.f32.mrb[0].mxu0
    %v851 = vadd.f32 %v778, %v850
    %v852 = vpop.f32.mrb[0].mxu0
    %853 = vdwg.mxu0
    %854 = vst [vmem:[#allocation3] sm:$0xf] %v851
    // Predicated region
    $region34: #{dgcnn_forward.1} parent=1 // pred_check
      _
    $region35: #{dgcnn_forward.1} parent=1 // pred_check_branch
      %856 = sbr.rel (0) target = $region37
    $region36: #{dgcnn_forward.1} parent=1 // pred_region
      %s858 = ssub.s32 64, 64
      %859 = vsyncadd [#allocation4], %s858
      %s861 = sshll.u32 [#allocation3], 4
      %s862 = int_to_ptr.vmem [resolvable:$true] %s861
      %864 = dma.vmem_to_hbm [thread:$0]  %s862, 64, %s8, [#allocation4]
    $region37: #{dgcnn_forward.1} parent=1 // pred_fallthru
      _
    // Predicated region
    $region38: #{dgcnn_forward.1} parent=1 // pred_check
      _
    $region39: #{dgcnn_forward.1} parent=1 // pred_check_branch
      %866 = sbr.rel (0) target = $region41
    $region40: #{dgcnn_forward.1} parent=1 // pred_region
      %867 = dma.done [#allocation4], 64
    $region41: #{dgcnn_forward.1} parent=1 // pred_fallthru
      _
    %868 = vsyncpa [#allocation4], 1

</llo_original>
